<compile_context>
chip_gen: v6e
topology: v6e:2x2x1
jax: 0.10.0
libtpu: 0.0.40
codegen_flags: <defaults>
</compile_context>

<pallas_src>
import functools

import jax
import jax.numpy as jnp
from jax import lax
from jax.experimental import pallas as pl
from jax.experimental.pallas import tpu as pltpu


def _prenorm_attention_kernel(x_ref, ln_g_ref, ln_b_ref, wq_ref, wk_ref,
                              wv_ref, wo_ref, bo_ref, out_ref, *, heads, eps):
    # ---- LayerNorm over the embedding dim (single-pass statistics) ----
    x = x_ref[0].astype(jnp.float32)                        # (N, D)
    n_tok, dim = x.shape
    mu = jnp.mean(x, axis=-1, keepdims=True)
    msq = jnp.mean(x * x, axis=-1, keepdims=True)
    inv_std = lax.rsqrt(msq - mu * mu + eps)                # rsqrt -> EUP
    xn = (x - mu) * inv_std * ln_g_ref[...] + ln_b_ref[...]

    # ---- head-batched projections: one batched MXU op per q/k/v ----
    xb = jnp.broadcast_to(xn[None], (heads, n_tok, dim))    # (H, N, D), ~4 KB

    def bmm(a, b, ca, cb):
        # batched matmul over leading head axis, f32 accumulation on the MXU
        return lax.dot_general(a, b, (((ca,), (cb,)), ((0,), (0,))),
                               preferred_element_type=jnp.float32)

    q = bmm(xb, wq_ref[...], 2, 1)                          # (H, N, d); scale
    k = bmm(xb, wk_ref[...], 2, 1)                          #   pre-folded in Wq
    v = bmm(xb, wv_ref[...], 2, 1)

    # ---- attention, batched over heads ----
    s = bmm(q, k, 2, 2)                                     # (H, N, N)
    s = s - jnp.max(s, axis=-1, keepdims=True)
    p = jnp.exp(s)
    p = p * pl.reciprocal(jnp.sum(p, axis=-1, keepdims=True), approx=True)
    o = bmm(p, v, 2, 1)                                     # (H, N, d)

    # ---- output projection: batched over heads, then reduced (== concat @ W) ----
    yh = bmm(o, wo_ref[...], 2, 1)                          # (H, N, D)
    y = jnp.sum(yh, axis=0) + bo_ref[...]                   # (N, D)
    out_ref[0] = y.astype(out_ref.dtype)


def prepare_attention_weights(w_qkv, w_out, *, heads, dim_head, scale):
    """One-time weight prep (wrapper/host side, amortized over all calls).

    w_qkv: (D, 3*H*d), columns ordered [Q | K | V] with heads contiguous in
           blocks of d (pre-transposed from the PyTorch Linear layout).
    w_out: (H*d, D), rows head-major.
    Returns wq, wk, wv of shape (H, D, d) (scale folded into wq) and
    wo of shape (H, d, D).
    """
    D = w_qkv.shape[0]
    hd = heads * dim_head

    def split(block):
        return block.reshape(D, heads, dim_head).transpose(1, 0, 2)  # (H, D, d)

    wq = split(w_qkv[:, 0 * hd:1 * hd]) * scale
    wk = split(w_qkv[:, 1 * hd:2 * hd])
    wv = split(w_qkv[:, 2 * hd:3 * hd])
    wo = w_out.reshape(heads, dim_head, D)                           # (H, d, D)
    return wq, wk, wv, wo


def prenorm_attention_forward(x, ln_g, ln_b, wq, wk, wv, wo, b_out, *, eps=1e-5):
    """x: (B, N, D); ln_g/ln_b/b_out: (1, D); wq/wk/wv: (H, D, d); wo: (H, d, D)."""
    B, N, D = x.shape
    H, _, d = wq.shape

    kernel = functools.partial(_prenorm_attention_kernel, heads=H, eps=eps)
    const3 = lambda b: (0, 0, 0)
    const2 = lambda b: (0, 0)
    return pl.pallas_call(
        kernel,
        out_shape=jax.ShapeDtypeStruct((B, N, D), x.dtype),
        grid_spec=pltpu.PrefetchScalarGridSpec(
            num_scalar_prefetch=0,
            grid=(B,),
            in_specs=[
                pl.BlockSpec((1, N, D), lambda b: (b, 0, 0)),   # x[b]
                pl.BlockSpec((1, D), const2),                   # LN gamma (resident)
                pl.BlockSpec((1, D), const2),                   # LN beta  (resident)
                pl.BlockSpec((H, D, d), const3),                # Wq (resident)
                pl.BlockSpec((H, D, d), const3),                # Wk (resident)
                pl.BlockSpec((H, D, d), const3),                # Wv (resident)
                pl.BlockSpec((H, d, D), const3),                # Wout (resident)
                pl.BlockSpec((1, D), const2),                   # b_out
            ],
            out_specs=pl.BlockSpec((1, N, D), lambda b: (b, 0, 0)),
        ),
        compiler_params=pltpu.CompilerParams(
            dimension_semantics=("parallel",)),
    )(x, ln_g, ln_b, wq, wk, wv, wo, b_out)


def prenorm_attention_ref(x, ln_g, ln_b, w_qkv, w_out, b_out, *,
                          heads, dim_head, scale, eps=1e-5):
    """Pure-JAX reference matching PyTorch PreNorm(dim, Attention(...))."""
    mu = jnp.mean(x, axis=-1, keepdims=True)
    var = jnp.mean((x - mu) ** 2, axis=-1, keepdims=True)
    xn = (x - mu) / jnp.sqrt(var + eps) * ln_g[0] + ln_b[0]

    hd = heads * dim_head
    qkv = xn @ w_qkv                                        # (B, N, 3*H*d)
    q, k, v = qkv[..., :hd], qkv[..., hd:2 * hd], qkv[..., 2 * hd:]

    def to_heads(t):
        b, n, _ = t.shape
        return t.reshape(b, n, heads, dim_head).transpose(0, 2, 1, 3)

    q, k, v = map(to_heads, (q, k, v))                      # (B, H, N, d)
    dots = jnp.einsum('bhnd,bhmd->bhnm', q, k) * scale
    attn = jax.nn.softmax(dots, axis=-1)
    o = jnp.einsum('bhnm,bhmd->bhnd', attn, v)
    b, h, n, d = o.shape
    o = o.transpose(0, 2, 1, 3).reshape(b, n, h * d)        # (B, N, H*d)
    return o @ w_out + b_out[0]


if __name__ == "__main__":
    # Small shapes consistent with the module (seq-based transformer block).
    B, N, dim = 2, 8, 32
    heads, dim_head = 4, 16
    inner_dim = heads * dim_head
    scale = dim_head ** -0.5

    key = jax.random.PRNGKey(0)
    kx, kqkv, kwo, kbo, kg, kb = jax.random.split(key, 6)

    x = jax.random.normal(kx, (B, N, dim), dtype=jnp.float32)

    # LayerNorm affine params (random to exercise the affine path).
    ln_g = 1.0 + 0.1 * jax.random.normal(kg, (1, dim), dtype=jnp.float32)
    ln_b = 0.1 * jax.random.normal(kb, (1, dim), dtype=jnp.float32)

    # to_qkv: Linear(dim, 3*inner_dim, bias=False), pre-transposed so qkv = xn @ w_qkv.
    w_qkv = jax.random.normal(kqkv, (dim, 3 * inner_dim), dtype=jnp.float32) * 0.05
    # to_out: Linear(inner_dim, dim) with bias; Dropout(0.0) is identity.
    w_out = jax.random.normal(kwo, (inner_dim, dim), dtype=jnp.float32) * 0.05
    b_out = jax.random.normal(kbo, (1, dim), dtype=jnp.float32) * 0.05

    # One-time weight preparation (head split + scale fold), outside the kernel.
    wq, wk, wv, wo = prepare_attention_weights(
        w_qkv, w_out, heads=heads, dim_head=dim_head, scale=scale)

    y = prenorm_attention_forward(x, ln_g, ln_b, wq, wk, wv, wo, b_out)
    y = jax.block_until_ready(y)

    y_ref = prenorm_attention_ref(x, ln_g, ln_b, w_qkv, w_out, b_out,
                                  heads=heads, dim_head=dim_head, scale=scale)
    assert y.shape == (B, N, dim)
    # tolerance covers the EUP approx-reciprocal in the softmax denominator
    assert jnp.allclose(y, y_ref, atol=1e-3, rtol=1e-3), "mismatch vs reference"

    print("KERNEL_OK")
</pallas_src>

<mosaic_0001>
module attributes {stable_mosaic.version = 11 : i64} {
  func.func @_prenorm_attention_kernel(%arg0: i32, %arg1: memref<1x8x32xf32, #tpu.memory_space<vmem>>, %arg2: memref<1x32xf32, #tpu.memory_space<vmem>>, %arg3: memref<1x32xf32, #tpu.memory_space<vmem>>, %arg4: memref<4x32x16xf32, #tpu.memory_space<vmem>>, %arg5: memref<4x32x16xf32, #tpu.memory_space<vmem>>, %arg6: memref<4x32x16xf32, #tpu.memory_space<vmem>>, %arg7: memref<4x16x32xf32, #tpu.memory_space<vmem>>, %arg8: memref<1x32xf32, #tpu.memory_space<vmem>>, %arg9: memref<1x8x32xf32, #tpu.memory_space<vmem>>) attributes {dimension_semantics = [#tpu.dimension_semantics<parallel>], iteration_bounds = array<i64: 2>, scalar_prefetch = 0 : i64, scratch_operands = 0 : i64, tpu.core_type = #tpu.core_type<tc>, window_params = [{transform_indices = @transform_0, window_bounds = array<i64: 1, 8, 32>}, {pipeline_mode = #tpu.pipeline_mode<synchronous>, transform_indices = @transform_1, window_bounds = array<i64: 1, 32>}, {pipeline_mode = #tpu.pipeline_mode<synchronous>, transform_indices = @transform_2, window_bounds = array<i64: 1, 32>}, {pipeline_mode = #tpu.pipeline_mode<synchronous>, transform_indices = @transform_3, window_bounds = array<i64: 4, 32, 16>}, {pipeline_mode = #tpu.pipeline_mode<synchronous>, transform_indices = @transform_4, window_bounds = array<i64: 4, 32, 16>}, {pipeline_mode = #tpu.pipeline_mode<synchronous>, transform_indices = @transform_5, window_bounds = array<i64: 4, 32, 16>}, {pipeline_mode = #tpu.pipeline_mode<synchronous>, transform_indices = @transform_6, window_bounds = array<i64: 4, 16, 32>}, {pipeline_mode = #tpu.pipeline_mode<synchronous>, transform_indices = @transform_7, window_bounds = array<i64: 1, 32>}, {transform_indices = @transform_8, window_bounds = array<i64: 1, 8, 32>}]} {
    %c0 = arith.constant 0 : index
    %c0_0 = arith.constant 0 : index
    %c0_1 = arith.constant 0 : index
    %0 = vector.load %arg1[%c0, %c0_0, %c0_1] : memref<1x8x32xf32, #tpu.memory_space<vmem>>, vector<1x8x32xf32>
    %1 = vector.shape_cast %0 : vector<1x8x32xf32> to vector<8x32xf32>
    %cst = arith.constant dense<0.000000e+00> : vector<8xf32>
    %2 = vector.multi_reduction <add>, %1, %cst [1] : vector<8x32xf32> to vector<8xf32>
    %3 = vector.shape_cast %2 : vector<8xf32> to vector<8x1xf32>
    %cst_2 = arith.constant 3.200000e+01 : f32
    %4 = vector.broadcast %cst_2 : f32 to vector<8x1xf32>
    %5 = arith.divf %3, %4 : vector<8x1xf32>
    %6 = arith.mulf %1, %1 : vector<8x32xf32>
    %cst_3 = arith.constant dense<0.000000e+00> : vector<8xf32>
    %7 = vector.multi_reduction <add>, %6, %cst_3 [1] : vector<8x32xf32> to vector<8xf32>
    %8 = vector.shape_cast %7 : vector<8xf32> to vector<8x1xf32>
    %cst_4 = arith.constant 3.200000e+01 : f32
    %9 = vector.broadcast %cst_4 : f32 to vector<8x1xf32>
    %10 = arith.divf %8, %9 : vector<8x1xf32>
    %11 = arith.mulf %5, %5 : vector<8x1xf32>
    %12 = arith.subf %10, %11 : vector<8x1xf32>
    %cst_5 = arith.constant 9.99999974E-6 : f32
    %13 = vector.broadcast %cst_5 : f32 to vector<8x1xf32>
    %14 = arith.addf %12, %13 : vector<8x1xf32>
    %15 = math.rsqrt %14 : vector<8x1xf32>
    %16 = vector.broadcast %5 : vector<8x1xf32> to vector<8x32xf32>
    %17 = arith.subf %1, %16 : vector<8x32xf32>
    %18 = vector.broadcast %15 : vector<8x1xf32> to vector<8x32xf32>
    %19 = arith.mulf %17, %18 : vector<8x32xf32>
    %c0_6 = arith.constant 0 : index
    %c0_7 = arith.constant 0 : index
    %20 = vector.load %arg2[%c0_6, %c0_7] : memref<1x32xf32, #tpu.memory_space<vmem>>, vector<1x32xf32>
    %21 = vector.broadcast %20 : vector<1x32xf32> to vector<8x32xf32>
    %22 = arith.mulf %19, %21 : vector<8x32xf32>
    %c0_8 = arith.constant 0 : index
    %c0_9 = arith.constant 0 : index
    %23 = vector.load %arg3[%c0_8, %c0_9] : memref<1x32xf32, #tpu.memory_space<vmem>>, vector<1x32xf32>
    %24 = vector.broadcast %23 : vector<1x32xf32> to vector<8x32xf32>
    %25 = arith.addf %22, %24 : vector<8x32xf32>
    %26 = vector.shape_cast %25 : vector<8x32xf32> to vector<1x8x32xf32>
    %27 = vector.shape_cast %26 : vector<1x8x32xf32> to vector<1x8x32xf32>
    %28 = vector.broadcast %27 : vector<1x8x32xf32> to vector<4x8x32xf32>
    %c0_10 = arith.constant 0 : index
    %c0_11 = arith.constant 0 : index
    %c0_12 = arith.constant 0 : index
    %29 = vector.load %arg4[%c0_10, %c0_11, %c0_12] : memref<4x32x16xf32, #tpu.memory_space<vmem>>, vector<4x32x16xf32>
    %cst_13 = arith.constant dense<0.000000e+00> : vector<4x8x16xf32>
    %30 = tpu.matmul %28, %29, %cst_13 {dimension_numbers = #tpu.dot_dimension_numbers<[2], [1], [1], [2], [0, 0, 0, 1, 1, 2], [0], [0]>} : vector<4x8x32xf32>, vector<4x32x16xf32>, vector<4x8x16xf32> -> vector<4x8x16xf32>
    %c0_14 = arith.constant 0 : index
    %c0_15 = arith.constant 0 : index
    %c0_16 = arith.constant 0 : index
    %31 = vector.load %arg5[%c0_14, %c0_15, %c0_16] : memref<4x32x16xf32, #tpu.memory_space<vmem>>, vector<4x32x16xf32>
    %cst_17 = arith.constant dense<0.000000e+00> : vector<4x8x16xf32>
    %32 = tpu.matmul %28, %31, %cst_17 {dimension_numbers = #tpu.dot_dimension_numbers<[2], [1], [1], [2], [0, 0, 0, 1, 1, 2], [0], [0]>} : vector<4x8x32xf32>, vector<4x32x16xf32>, vector<4x8x16xf32> -> vector<4x8x16xf32>
    %c0_18 = arith.constant 0 : index
    %c0_19 = arith.constant 0 : index
    %c0_20 = arith.constant 0 : index
    %33 = vector.load %arg6[%c0_18, %c0_19, %c0_20] : memref<4x32x16xf32, #tpu.memory_space<vmem>>, vector<4x32x16xf32>
    %cst_21 = arith.constant dense<0.000000e+00> : vector<4x8x16xf32>
    %34 = tpu.matmul %28, %33, %cst_21 {dimension_numbers = #tpu.dot_dimension_numbers<[2], [1], [1], [2], [0, 0, 0, 1, 1, 2], [0], [0]>} : vector<4x8x32xf32>, vector<4x32x16xf32>, vector<4x8x16xf32> -> vector<4x8x16xf32>
    %cst_22 = arith.constant dense<0.000000e+00> : vector<4x8x8xf32>
    %35 = tpu.matmul %30, %32, %cst_22 {dimension_numbers = #tpu.dot_dimension_numbers<[2], [2], [1], [1], [0, 0, 0, 1, 1, 1], [0], [0]>} : vector<4x8x16xf32>, vector<4x8x16xf32>, vector<4x8x8xf32> -> vector<4x8x8xf32>
    %cst_23 = arith.constant dense<0xFF800000> : vector<4x8xf32>
    %36 = vector.multi_reduction <maximumf>, %35, %cst_23 [2] : vector<4x8x8xf32> to vector<4x8xf32>
    %37 = vector.shape_cast %36 : vector<4x8xf32> to vector<4x8x1xf32>
    %38 = vector.broadcast %37 : vector<4x8x1xf32> to vector<4x8x8xf32>
    %39 = arith.subf %35, %38 : vector<4x8x8xf32>
    %40 = math.exp %39 : vector<4x8x8xf32>
    %cst_24 = arith.constant dense<0.000000e+00> : vector<4x8xf32>
    %41 = vector.multi_reduction <add>, %40, %cst_24 [2] : vector<4x8x8xf32> to vector<4x8xf32>
    %42 = vector.shape_cast %41 : vector<4x8xf32> to vector<4x8x1xf32>
    %43 = tpu.reciprocal %42 {approx = true} : vector<4x8x1xf32> -> vector<4x8x1xf32>
    %44 = vector.broadcast %43 : vector<4x8x1xf32> to vector<4x8x8xf32>
    %45 = arith.mulf %40, %44 : vector<4x8x8xf32>
    %cst_25 = arith.constant dense<0.000000e+00> : vector<4x8x16xf32>
    %46 = tpu.matmul %45, %34, %cst_25 {dimension_numbers = #tpu.dot_dimension_numbers<[2], [1], [1], [2], [0, 0, 0, 1, 1, 2], [0], [0]>} : vector<4x8x8xf32>, vector<4x8x16xf32>, vector<4x8x16xf32> -> vector<4x8x16xf32>
    %c0_26 = arith.constant 0 : index
    %c0_27 = arith.constant 0 : index
    %c0_28 = arith.constant 0 : index
    %47 = vector.load %arg7[%c0_26, %c0_27, %c0_28] : memref<4x16x32xf32, #tpu.memory_space<vmem>>, vector<4x16x32xf32>
    %cst_29 = arith.constant dense<0.000000e+00> : vector<4x8x32xf32>
    %48 = tpu.matmul %46, %47, %cst_29 {dimension_numbers = #tpu.dot_dimension_numbers<[2], [1], [1], [2], [0, 0, 0, 1, 1, 2], [0], [0]>} : vector<4x8x16xf32>, vector<4x16x32xf32>, vector<4x8x32xf32> -> vector<4x8x32xf32>
    %cst_30 = arith.constant dense<0.000000e+00> : vector<8x32xf32>
    %49 = vector.multi_reduction <add>, %48, %cst_30 [0] : vector<4x8x32xf32> to vector<8x32xf32>
    %c0_31 = arith.constant 0 : index
    %c0_32 = arith.constant 0 : index
    %50 = vector.load %arg8[%c0_31, %c0_32] : memref<1x32xf32, #tpu.memory_space<vmem>>, vector<1x32xf32>
    %51 = vector.broadcast %50 : vector<1x32xf32> to vector<8x32xf32>
    %52 = arith.addf %49, %51 : vector<8x32xf32>
    %c0_33 = arith.constant 0 : index
    %c0_34 = arith.constant 0 : index
    %c0_35 = arith.constant 0 : index
    %53 = vector.load %arg9[%c0_33, %c0_34, %c0_35] : memref<1x8x32xf32, #tpu.memory_space<vmem>>, vector<1x8x32xf32>
    %54 = vector.shape_cast %53 : vector<1x8x32xf32> to vector<8x32xf32>
    %55 = vector.shape_cast %52 : vector<8x32xf32> to vector<1x8x32xf32>
    tpu.vector_store %arg9[%c0_33, %c0_34, %c0_35], %55 {strides = array<i32>} : memref<1x8x32xf32, #tpu.memory_space<vmem>>, vector<1x8x32xf32>,
    return
  }
  func.func @transform_0(%arg0: i32) -> (i32, i32, i32) {
    %c0_i32 = arith.constant 0 : i32
    %c0_i32_0 = arith.constant 0 : i32
    %c0_i32_1 = arith.constant 0 : i32
    return %arg0, %c0_i32, %c0_i32_0 : i32, i32, i32
  }
  func.func @transform_1(%arg0: i32) -> (i32, i32) {
    %c0_i32 = arith.constant 0 : i32
    %c0_i32_0 = arith.constant 0 : i32
    %c0_i32_1 = arith.constant 0 : i32
    return %c0_i32, %c0_i32_0 : i32, i32
  }
  func.func @transform_2(%arg0: i32) -> (i32, i32) {
    %c0_i32 = arith.constant 0 : i32
    %c0_i32_0 = arith.constant 0 : i32
    %c0_i32_1 = arith.constant 0 : i32
    return %c0_i32, %c0_i32_0 : i32, i32
  }
  func.func @transform_3(%arg0: i32) -> (i32, i32, i32) {
    %c0_i32 = arith.constant 0 : i32
    %c0_i32_0 = arith.constant 0 : i32
    %c0_i32_1 = arith.constant 0 : i32
    %c0_i32_2 = arith.constant 0 : i32
    return %c0_i32, %c0_i32_0, %c0_i32_1 : i32, i32, i32
  }
  func.func @transform_4(%arg0: i32) -> (i32, i32, i32) {
    %c0_i32 = arith.constant 0 : i32
    %c0_i32_0 = arith.constant 0 : i32
    %c0_i32_1 = arith.constant 0 : i32
    %c0_i32_2 = arith.constant 0 : i32
    return %c0_i32, %c0_i32_0, %c0_i32_1 : i32, i32, i32
  }
  func.func @transform_5(%arg0: i32) -> (i32, i32, i32) {
    %c0_i32 = arith.constant 0 : i32
    %c0_i32_0 = arith.constant 0 : i32
    %c0_i32_1 = arith.constant 0 : i32
    %c0_i32_2 = arith.constant 0 : i32
    return %c0_i32, %c0_i32_0, %c0_i32_1 : i32, i32, i32
  }
  func.func @transform_6(%arg0: i32) -> (i32, i32, i32) {
    %c0_i32 = arith.constant 0 : i32
    %c0_i32_0 = arith.constant 0 : i32
    %c0_i32_1 = arith.constant 0 : i32
    %c0_i32_2 = arith.constant 0 : i32
    return %c0_i32, %c0_i32_0, %c0_i32_1 : i32, i32, i32
  }
  func.func @transform_7(%arg0: i32) -> (i32, i32) {
    %c0_i32 = arith.constant 0 : i32
    %c0_i32_0 = arith.constant 0 : i32
    %c0_i32_1 = arith.constant 0 : i32
    return %c0_i32, %c0_i32_0 : i32, i32
  }
  func.func @transform_8(%arg0: i32) -> (i32, i32, i32) {
    %c0_i32 = arith.constant 0 : i32
    %c0_i32_0 = arith.constant 0 : i32
    %c0_i32_1 = arith.constant 0 : i32
    return %arg0, %c0_i32, %c0_i32_0 : i32, i32, i32
  }
}

</mosaic_0001>

<llo_original>
// kernel: tpu_custom_call.1
$region0: #{tpu_custom_call.1}
  #allocation0 [shape = 'u32[]', space=smem, size = 0x4, offset = 0x4, fixed_abs, tag = 'smem constant byte address 0x4 - core index']
  #allocation1 [shape = 'u32[144,128]{1,0:T(1,128)}', space=vmem, size = 0x12000, scoped, tag = 'internal scratch']
  %s0 = inlined_call_operand.vmem [shape: f32[2,8,32], index: 0, kind: input, shape index: {}]
  %s1 = inlined_call_operand.vmem [shape: f32[1,32], index: 1, kind: input, shape index: {}]
  %s2 = inlined_call_operand.vmem [shape: f32[1,32], index: 2, kind: input, shape index: {}]
  %s3 = inlined_call_operand.vmem [shape: f32[4,32,16], index: 3, kind: input, shape index: {}]
  %s4 = inlined_call_operand.vmem [shape: f32[4,32,16], index: 4, kind: input, shape index: {}]
  %s5 = inlined_call_operand.vmem [shape: f32[4,32,16], index: 5, kind: input, shape index: {}]
  %s6 = inlined_call_operand.vmem [shape: f32[4,16,32], index: 6, kind: input, shape index: {}]
  %s7 = inlined_call_operand.vmem [shape: f32[1,32], index: 7, kind: input, shape index: {}]
  %s8 = inlined_call_operand.hbm [shape: f32[2,8,32], index: 8, kind: output, shape index: {}]
  %s9 = sld [smem:[#allocation0]]
  $region65: #{tpu_custom_call.1} parent=0
    _
  %s11 = ssub.s32 1, %s9
  %s12 = scalar_select 0, %s11, %s9
  $region1: #{tpu_custom_call.1} parent=0
    #allocation2 [shape = 'u8[8192]{0}', space=vmem, size = 0x2000, scoped, tag = 'output window, operand 0']
    #allocation3 [shape = 's32[2]{0}', space=sflag, size = 0x8, scoped, tag = 'scoped memory for tpu_custom_call.1']
    %13 = vsyncpa [#allocation3], 0
    %s14 = scalar_lea.sflag [#allocation3], 1
    %15 = vsyncpa %s14, 0
    loop: start=0, step=1, limit=4
    $region2: #{tpu_custom_call.1} parent=1 // loop_pre_header
      _
    $region3: #{tpu_custom_call.1} parent=1 // loop_header
      %s17 = sphi 0, %s21
      %p18 = scmp.ge.s32.totalorder %s17, 4
      %s27 = sphi 0, %s29
      %s30 = sphi 0, %s27
      %s31 = sphi 0, %s30
      %s47 = sphi 0, %s31
      %s51 = sphi 0, %s51
      %s53 = sphi 0, %s51
      %s54 = sphi 0, %s53
      %s68 = sphi 0, %s54
      %s72 = sphi 0, %s72
      %s74 = sphi 0, %s72
      %s75 = sphi 0, %s74
      %s89 = sphi 0, %s75
      %s93 = sphi 0, %s93
      %s95 = sphi 0, %s93
      %s96 = sphi 0, %s95
      %s110 = sphi 0, %s96
      %s114 = sphi 0, %s114
      %s116 = sphi 0, %s114
      %s117 = sphi 0, %s116
      %s131 = sphi 0, %s117
      %s135 = sphi 0, %s135
      %s137 = sphi 0, %s135
      %s138 = sphi 0, %s137
      %s152 = sphi 0, %s138
      %s156 = sphi 0, %s156
      %s158 = sphi 0, %s156
      %s159 = sphi 0, %s158
      %s173 = sphi 0, %s159
      %s177 = sphi 0, %s177
      %s179 = sphi 0, %s177
      %s180 = sphi 0, %s179
      %s194 = sphi 0, %s180
      %s200 = sphi 0, %s202
      %s203 = sphi 0, %s200
      %s204 = sphi 0, %s203
      %s220 = sphi 0, %s204
    $region4: #{tpu_custom_call.1} parent=1 // loop_header_branch
      %20 = sbr.rel (%p18) target = $region8
    $region5: #{tpu_custom_call.1} parent=1 // loop_body
      %s22 = ssub.s32 %s17, 1
      %s23 = ssub.s32 %s17, 2
      %s24 = sadd.s32 %s17, 1
      %s25 = ssub.s32 %s17, %s24
      %p26 = scmp.eq.s32.totalorder %s25, 0
      %s28 = sadd.s32 %s27, 1
      %s29 = scalar_select %p26, %s27, %s28
      %p32 = pneg %p26
      %p33 = scmp.eq.s32.totalorder %s17, 1
      %p34 = por %p32, %p33
      %p35 = scmp.ne.s32.totalorder %s27, %s30
      %p36 = scmp.eq.s32.totalorder %s17, 0
      %p37 = por %p35, %p36
      %p38 = scmp.ne.s32.totalorder %s27, %s30
      %p39 = scmp.eq.s32.totalorder %s22, 1
      %p40 = por %p38, %p39
      %p41 = scmp.ne.s32.totalorder %s30, %s31
      %p42 = scmp.eq.s32.totalorder %s22, 0
      %p43 = por %p41, %p42
      %p44 = scmp.ne.s32.totalorder %s30, %s31
      %p45 = scmp.eq.s32.totalorder %s23, 1
      %p46 = por %p44, %p45
      %p48 = scmp.ne.s32.totalorder %s31, %s47
      %p49 = scmp.eq.s32.totalorder %s23, 0
      %p50 = por %p48, %p49
      %s52 = sadd.s32 %s51, 1
      %p55 = scmp.eq.s32.totalorder %s17, 1
      %p56 = scmp.ne.s32.totalorder %s51, %s53
      %p57 = scmp.eq.s32.totalorder %s17, 0
      %p58 = por %p56, %p57
      %p59 = scmp.ne.s32.totalorder %s51, %s53
      %p60 = scmp.eq.s32.totalorder %s22, 1
      %p61 = por %p59, %p60
      %p62 = scmp.ne.s32.totalorder %s53, %s54
      %p63 = scmp.eq.s32.totalorder %s22, 0
      %p64 = por %p62, %p63
      %p65 = scmp.ne.s32.totalorder %s53, %s54
      %p66 = scmp.eq.s32.totalorder %s23, 1
      %p67 = por %p65, %p66
      %p69 = scmp.ne.s32.totalorder %s54, %s68
      %p70 = scmp.eq.s32.totalorder %s23, 0
      %p71 = por %p69, %p70
      %s73 = sadd.s32 %s72, 1
      %p76 = scmp.eq.s32.totalorder %s17, 1
      %p77 = scmp.ne.s32.totalorder %s72, %s74
      %p78 = scmp.eq.s32.totalorder %s17, 0
      %p79 = por %p77, %p78
      %p80 = scmp.ne.s32.totalorder %s72, %s74
      %p81 = scmp.eq.s32.totalorder %s22, 1
      %p82 = por %p80, %p81
      %p83 = scmp.ne.s32.totalorder %s74, %s75
      %p84 = scmp.eq.s32.totalorder %s22, 0
      %p85 = por %p83, %p84
      %p86 = scmp.ne.s32.totalorder %s74, %s75
      %p87 = scmp.eq.s32.totalorder %s23, 1
      %p88 = por %p86, %p87
      %p90 = scmp.ne.s32.totalorder %s75, %s89
      %p91 = scmp.eq.s32.totalorder %s23, 0
      %p92 = por %p90, %p91
      %s94 = sadd.s32 %s93, 1
      %p97 = scmp.eq.s32.totalorder %s17, 1
      %p98 = scmp.ne.s32.totalorder %s93, %s95
      %p99 = scmp.eq.s32.totalorder %s17, 0
      %p100 = por %p98, %p99
      %p101 = scmp.ne.s32.totalorder %s93, %s95
      %p102 = scmp.eq.s32.totalorder %s22, 1
      %p103 = por %p101, %p102
      %p104 = scmp.ne.s32.totalorder %s95, %s96
      %p105 = scmp.eq.s32.totalorder %s22, 0
      %p106 = por %p104, %p105
      %p107 = scmp.ne.s32.totalorder %s95, %s96
      %p108 = scmp.eq.s32.totalorder %s23, 1
      %p109 = por %p107, %p108
      %p111 = scmp.ne.s32.totalorder %s96, %s110
      %p112 = scmp.eq.s32.totalorder %s23, 0
      %p113 = por %p111, %p112
      %s115 = sadd.s32 %s114, 1
      %p118 = scmp.eq.s32.totalorder %s17, 1
      %p119 = scmp.ne.s32.totalorder %s114, %s116
      %p120 = scmp.eq.s32.totalorder %s17, 0
      %p121 = por %p119, %p120
      %p122 = scmp.ne.s32.totalorder %s114, %s116
      %p123 = scmp.eq.s32.totalorder %s22, 1
      %p124 = por %p122, %p123
      %p125 = scmp.ne.s32.totalorder %s116, %s117
      %p126 = scmp.eq.s32.totalorder %s22, 0
      %p127 = por %p125, %p126
      %p128 = scmp.ne.s32.totalorder %s116, %s117
      %p129 = scmp.eq.s32.totalorder %s23, 1
      %p130 = por %p128, %p129
      %p132 = scmp.ne.s32.totalorder %s117, %s131
      %p133 = scmp.eq.s32.totalorder %s23, 0
      %p134 = por %p132, %p133
      %s136 = sadd.s32 %s135, 1
      %p139 = scmp.eq.s32.totalorder %s17, 1
      %p140 = scmp.ne.s32.totalorder %s135, %s137
      %p141 = scmp.eq.s32.totalorder %s17, 0
      %p142 = por %p140, %p141
      %p143 = scmp.ne.s32.totalorder %s135, %s137
      %p144 = scmp.eq.s32.totalorder %s22, 1
      %p145 = por %p143, %p144
      %p146 = scmp.ne.s32.totalorder %s137, %s138
      %p147 = scmp.eq.s32.totalorder %s22, 0
      %p148 = por %p146, %p147
      %p149 = scmp.ne.s32.totalorder %s137, %s138
      %p150 = scmp.eq.s32.totalorder %s23, 1
      %p151 = por %p149, %p150
      %p153 = scmp.ne.s32.totalorder %s138, %s152
      %p154 = scmp.eq.s32.totalorder %s23, 0
      %p155 = por %p153, %p154
      %s157 = sadd.s32 %s156, 1
      %p160 = scmp.eq.s32.totalorder %s17, 1
      %p161 = scmp.ne.s32.totalorder %s156, %s158
      %p162 = scmp.eq.s32.totalorder %s17, 0
      %p163 = por %p161, %p162
      %p164 = scmp.ne.s32.totalorder %s156, %s158
      %p165 = scmp.eq.s32.totalorder %s22, 1
      %p166 = por %p164, %p165
      %p167 = scmp.ne.s32.totalorder %s158, %s159
      %p168 = scmp.eq.s32.totalorder %s22, 0
      %p169 = por %p167, %p168
      %p170 = scmp.ne.s32.totalorder %s158, %s159
      %p171 = scmp.eq.s32.totalorder %s23, 1
      %p172 = por %p170, %p171
      %p174 = scmp.ne.s32.totalorder %s159, %s173
      %p175 = scmp.eq.s32.totalorder %s23, 0
      %p176 = por %p174, %p175
      %s178 = sadd.s32 %s177, 1
      %p181 = scmp.eq.s32.totalorder %s17, 1
      %p182 = scmp.ne.s32.totalorder %s177, %s179
      %p183 = scmp.eq.s32.totalorder %s17, 0
      %p184 = por %p182, %p183
      %p185 = scmp.ne.s32.totalorder %s177, %s179
      %p186 = scmp.eq.s32.totalorder %s22, 1
      %p187 = por %p185, %p186
      %p188 = scmp.ne.s32.totalorder %s179, %s180
      %p189 = scmp.eq.s32.totalorder %s22, 0
      %p190 = por %p188, %p189
      %p191 = scmp.ne.s32.totalorder %s179, %s180
      %p192 = scmp.eq.s32.totalorder %s23, 1
      %p193 = por %p191, %p192
      %p195 = scmp.ne.s32.totalorder %s180, %s194
      %p196 = scmp.eq.s32.totalorder %s23, 0
      %p197 = por %p195, %p196
      %s198 = ssub.s32 %s17, %s24
      %p199 = scmp.eq.s32.totalorder %s198, 0
      %s201 = sadd.s32 %s200, 1
      %s202 = scalar_select %p199, %s200, %s201
      %p205 = pneg %p199
      %p206 = scmp.eq.s32.totalorder %s17, 1
      %p207 = por %p205, %p206
      %p208 = scmp.ne.s32.totalorder %s200, %s203
      %p209 = scmp.eq.s32.totalorder %s17, 0
      %p210 = por %p208, %p209
      %p211 = scmp.ne.s32.totalorder %s200, %s203
      %p212 = scmp.eq.s32.totalorder %s22, 1
      %p213 = por %p211, %p212
      %p214 = scmp.ne.s32.totalorder %s203, %s204
      %p215 = scmp.eq.s32.totalorder %s22, 0
      %p216 = por %p214, %p215
      %p217 = scmp.ne.s32.totalorder %s203, %s204
      %p218 = scmp.eq.s32.totalorder %s23, 1
      %p219 = por %p217, %p218
      %p221 = scmp.ne.s32.totalorder %s204, %s220
      %p222 = scmp.eq.s32.totalorder %s23, 0
      %p223 = por %p221, %p222
      %p224 = scmp.le.s32.totalorder 1, %s17
      %p225 = scmp.lt.s32.totalorder %s17, 3
      %p226 = pnand %p224, %p225
      %p227 = pneg %p226
      // Predicated region
      $region9: #{tpu_custom_call.1} parent=5 // pred_check
        _
      $region10: #{tpu_custom_call.1} parent=5 // pred_check_branch
        %229 = sbr.rel (%p226) target = $region12
      $region11: #{tpu_custom_call.1} parent=5 // pred_region
        %s230 = ssub.s32 %s17, 1
        // Predicated region
        $region13: #{tpu_custom_call.1} parent=11 // pred_check
          %p231 = pneg %p64
        $region14: #{tpu_custom_call.1} parent=11 // pred_check_branch
          %233 = sbr.rel (%p231) target = $region16
        $region15: #{tpu_custom_call.1} parent=11 // pred_region
          _
        $region16: #{tpu_custom_call.1} parent=11 // pred_fallthru
          _
        // Predicated region
        $region17: #{tpu_custom_call.1} parent=11 // pred_check
          %p234 = pneg %p85
        $region18: #{tpu_custom_call.1} parent=11 // pred_check_branch
          %236 = sbr.rel (%p234) target = $region20
        $region19: #{tpu_custom_call.1} parent=11 // pred_region
          _
        $region20: #{tpu_custom_call.1} parent=11 // pred_fallthru
          _
        // Predicated region
        $region21: #{tpu_custom_call.1} parent=11 // pred_check
          %p237 = pneg %p106
        $region22: #{tpu_custom_call.1} parent=11 // pred_check_branch
          %239 = sbr.rel (%p237) target = $region24
        $region23: #{tpu_custom_call.1} parent=11 // pred_region
          _
        $region24: #{tpu_custom_call.1} parent=11 // pred_fallthru
          _
        // Predicated region
        $region25: #{tpu_custom_call.1} parent=11 // pred_check
          %p240 = pneg %p127
        $region26: #{tpu_custom_call.1} parent=11 // pred_check_branch
          %242 = sbr.rel (%p240) target = $region28
        $region27: #{tpu_custom_call.1} parent=11 // pred_region
          _
        $region28: #{tpu_custom_call.1} parent=11 // pred_fallthru
          _
        // Predicated region
        $region29: #{tpu_custom_call.1} parent=11 // pred_check
          %p243 = pneg %p148
        $region30: #{tpu_custom_call.1} parent=11 // pred_check_branch
          %245 = sbr.rel (%p243) target = $region32
        $region31: #{tpu_custom_call.1} parent=11 // pred_region
          _
        $region32: #{tpu_custom_call.1} parent=11 // pred_fallthru
          _
        // Predicated region
        $region33: #{tpu_custom_call.1} parent=11 // pred_check
          %p246 = pneg %p169
        $region34: #{tpu_custom_call.1} parent=11 // pred_check_branch
          %248 = sbr.rel (%p246) target = $region36
        $region35: #{tpu_custom_call.1} parent=11 // pred_region
          _
        $region36: #{tpu_custom_call.1} parent=11 // pred_fallthru
          _
        // Predicated region
        $region37: #{tpu_custom_call.1} parent=11 // pred_check
          %p249 = pneg %p190
        $region38: #{tpu_custom_call.1} parent=11 // pred_check_branch
          %251 = sbr.rel (%p249) target = $region40
        $region39: #{tpu_custom_call.1} parent=11 // pred_region
          _
        $region40: #{tpu_custom_call.1} parent=11 // pred_fallthru
          _
      $region12: #{tpu_custom_call.1} parent=5 // pred_fallthru
        _
      %p252 = scmp.lt.s32.totalorder %s17, 2
      // Predicated region
      $region41: #{tpu_custom_call.1} parent=5 // pred_check
        %p253 = pneg %p252
      $region42: #{tpu_custom_call.1} parent=5 // pred_check_branch
        %255 = sbr.rel (%p253) target = $region44
      $region43: #{tpu_custom_call.1} parent=5 // pred_region
        // Predicated region
        $region45: #{tpu_custom_call.1} parent=43 // pred_check
          %p256 = pneg %p37
        $region46: #{tpu_custom_call.1} parent=43 // pred_check_branch
          %258 = sbr.rel (%p256) target = $region48
        $region47: #{tpu_custom_call.1} parent=43 // pred_region
          %p259 = scmp.lt.s32.totalorder %s17, 1
          %s260 = scalar_select %p259, %s17, 1
          %s261 = smul.addr %s260, 8
          %s262 = scalar_lea.vmem %s0, %s261
        $region48: #{tpu_custom_call.1} parent=43 // pred_fallthru
          _
      $region44: #{tpu_custom_call.1} parent=5 // pred_fallthru
        _
      %p263 = scmp.le.s32.totalorder 1, %s17
      %p264 = scmp.lt.s32.totalorder %s17, 3
      %p265 = pnand %p263, %p264
      %p266 = pneg %p265
      // Predicated region
      $region49: #{tpu_custom_call.1} parent=5 // pred_check
        _
      $region50: #{tpu_custom_call.1} parent=5 // pred_check_branch
        %268 = sbr.rel (%p265) target = $region52
      $region51: #{tpu_custom_call.1} parent=5 // pred_region
        %s269 = ssub.s32 %s17, 1
        %p270 = scmp.lt.s32.totalorder %s22, 1
        %s271 = scalar_select %p270, %s22, 1
        %s272 = smul.addr %s271, 8
        %s273 = scalar_lea.vmem %s0, %s272
        %p274 = pneg %p43
        %p275 = pneg %p40
        %p276 = pneg %p64
        %p277 = pneg %p61
        %p278 = pneg %p85
        %p279 = pneg %p82
        %p280 = pneg %p106
        %p281 = pneg %p103
        %p282 = pneg %p127
        %p283 = pneg %p124
        %p284 = pneg %p148
        %p285 = pneg %p145
        %p286 = pneg %p169
        %p287 = pneg %p166
        %p288 = pneg %p190
        %p289 = pneg %p187
        %p290 = pneg %p216
        %p291 = pneg %p213
        %s292 = sand.u32 %s203, 1
        %s293 = scalar_lea.sflag [#allocation3], %s292
        %s294 = sand.u32 %s203, 1
        %s295 = smul.addr %s294, 8
        %s296 = scalar_lea.vmem [#allocation2], %s295
        %p297 = scmp.lt.s32.totalorder %s22, 1
        %s298 = scalar_select %p297, %s22, 1
        %s299 = smul.addr %s298, 8
        %s300 = scalar_lea.vmem %s0, %s299
        %v301 = vld [vmem:[%s300] sm:$0xff]
        %vm302 = vcmask 261120
        %v303 = vsel %vm302, %v301, 0.0
        %304 = vadd.xlane.f32.xlu0 %v303
        %v305 = vpop.xlane.xlu0 %304
        %v306 = vrcp.pop 32.0
        %v307 = vmul.f32 %v305, %v306
        %v308 = vmul.f32 %v301, %v301
        %v309 = vsel %vm302, %v308, 0.0
        %310 = vadd.xlane.f32.xlu0 %v309
        %v311 = vpop.xlane.xlu0 %310
        %v312 = vmul.f32 %v311, %v306
        %v313 = vmul.f32 %v307, %v307
        %v314 = vsub.f32 %v312, %v313
        %v315 = vadd.f32 %v314, 1e-05
        %v316 = vrsqrt.pop %v315
        %v317 = vsub.f32 %v301, %v307
        %v318 = vmul.f32 %v317, %v316
        %v319 = vld [vmem:[%s1] sm:$0x1]
        %v321 = vlaneseq
        %v322 = vshrl.u32 %v321, 7
        %v323 = vsub.s32 0, %v322
        %v324 = vrot.slane %v319, %v323
        %v326 = vmul.f32 %v318, %v324
        %v327 = vld [vmem:[%s2] sm:$0x1]
        %v329 = vlaneseq
        %v330 = vshrl.u32 %v329, 7
        %v331 = vsub.s32 0, %v330
        %v332 = vrot.slane %v327, %v331
        %v334 = vadd.f32 %v326, %v332
        %v335 = vld [vmem:[%s3] sm:$0xff]
        %v336 = vld [vmem:[%s3 + $0x8] sm:$0xff]
        %v337 = vld [vmem:[%s3 + $0x10] sm:$0xff]
        %v338 = vld [vmem:[%s3 + $0x18] sm:$0xff]
        %v339 = vld [vmem:[%s3 + $0x20] sm:$0xff]
        %v340 = vld [vmem:[%s3 + $0x28] sm:$0xff]
        %v341 = vld [vmem:[%s3 + $0x30] sm:$0xff]
        %v342 = vld [vmem:[%s3 + $0x38] sm:$0xff]
        %v343 = vld [vmem:[%s3 + $0x40] sm:$0xff]
        %v344 = vld [vmem:[%s3 + $0x48] sm:$0xff]
        %v345 = vld [vmem:[%s3 + $0x50] sm:$0xff]
        %v346 = vld [vmem:[%s3 + $0x58] sm:$0xff]
        %v347 = vld [vmem:[%s3 + $0x60] sm:$0xff]
        %v348 = vld [vmem:[%s3 + $0x68] sm:$0xff]
        %v349 = vld [vmem:[%s3 + $0x70] sm:$0xff]
        %v350 = vld [vmem:[%s3 + $0x78] sm:$0xff]
        %v352 = vsel %vm302, %v334, 0
        %354 = vmatprep.subr.mxu0 0.0
        %355 = vmatpush1.msra.mxu0 0.0
        %356 = vmatprep.subr.mxu0 0.0
        %357 = vmatpush1.msra.mxu0 0.0
        %358 = vmatprep.subr.mxu0 0.0
        %359 = vmatpush1.msra.mxu0 0.0
        %360 = vmatprep.subr.mxu0 0.0
        %361 = vmatpush1.msra.mxu0 0.0
        %362 = vmatprep.subr.mxu0 0.0
        %363 = vmatpush1.msra.mxu0 0.0
        %364 = vmatprep.subr.mxu0 0.0
        %365 = vmatpush1.msra.mxu0 0.0
        %366 = vmatprep.subr.mxu0 0.0
        %367 = vmatpush1.msra.mxu0 0.0
        %368 = vmatprep.subr.mxu0 0.0
        %369 = vmatpush1.msra.mxu0 0.0
        %370 = vmatprep.subr.mxu0 0.0
        %371 = vmatpush1.msra.mxu0 0.0
        %372 = vmatprep.subr.mxu0 0.0
        %373 = vmatpush1.msra.mxu0 0.0
        %374 = vmatprep.subr.mxu0 0.0
        %375 = vmatpush1.msra.mxu0 0.0
        %376 = vmatprep.subr.mxu0 0.0
        %377 = vmatpush1.msra.mxu0 0.0
        %378 = vmatprep.subr.mxu0 0.0
        %379 = vmatpush1.msra.mxu0 %v338
        %380 = vmatprep.subr.mxu0 0.0
        %381 = vmatpush1.msra.mxu0 %v337
        %382 = vmatprep.subr.mxu0 0.0
        %383 = vmatpush1.msra.mxu0 %v336
        %384 = vmatprep.subr.mxu0 0.0
        %385 = vmatpush1.msra.mxu0 %v335
        %386 = vmatprep.subr.mxu0 0.0
        %387 = vmatpush2.msra.mxu0 0.0
        %388 = vmatprep.subr.mxu0 0.0
        %389 = vmatpush2.msra.mxu0 0.0
        %390 = vmatprep.subr.mxu0 0.0
        %391 = vmatpush2.msra.mxu0 0.0
        %392 = vmatprep.subr.mxu0 0.0
        %393 = vmatpush2.msra.mxu0 0.0
        %394 = vmatprep.subr.mxu0 0.0
        %395 = vmatpush2.msra.mxu0 0.0
        %396 = vmatprep.subr.mxu0 0.0
        %397 = vmatpush2.msra.mxu0 0.0
        %398 = vmatprep.subr.mxu0 0.0
        %399 = vmatpush2.msra.mxu0 0.0
        %400 = vmatprep.subr.mxu0 0.0
        %401 = vmatpush2.msra.mxu0 0.0
        %402 = vmatprep.subr.mxu0 0.0
        %403 = vmatpush2.msra.mxu0 0.0
        %404 = vmatprep.subr.mxu0 0.0
        %405 = vmatpush2.msra.mxu0 0.0
        %406 = vmatprep.subr.mxu0 0.0
        %407 = vmatpush2.msra.mxu0 0.0
        %408 = vmatprep.subr.mxu0 0.0
        %409 = vmatpush2.msra.mxu0 0.0
        %410 = vmatprep.subr.mxu0 0.0
        %411 = vmatpush2.msra.mxu0 0.0
        %412 = vmatprep.subr.mxu0 0.0
        %413 = vmatpush2.msra.mxu0 0.0
        %414 = vmatprep.subr.mxu0 0.0
        %415 = vmatpush2.msra.mxu0 0.0
        %416 = vmatprep.subr.mxu0 0.0
        %417 = vmatpush2.msra.mxu0 0.0
        %418 = vmatprep.mubr.f32.mxu0 0.0
        %419 = vmatmul.mubr.f32.gmra.mxu0 %v352
        %v420 = vpop.f32.mrf.mxu0
        %v421 = vadd.f32 0.0, %v420
        %v422 = vpop.f32.mrf.mxu0
        %423 = vdwg.mxu0
        %424 = vmatprep.subr.mxu0 0.0
        %425 = vmatpush1.msra.mxu0 0.0
        %426 = vmatprep.subr.mxu0 0.0
        %427 = vmatpush1.msra.mxu0 0.0
        %428 = vmatprep.subr.mxu0 0.0
        %429 = vmatpush1.msra.mxu0 0.0
        %430 = vmatprep.subr.mxu0 0.0
        %431 = vmatpush1.msra.mxu0 0.0
        %432 = vmatprep.subr.mxu0 0.0
        %433 = vmatpush1.msra.mxu0 0.0
        %434 = vmatprep.subr.mxu0 0.0
        %435 = vmatpush1.msra.mxu0 0.0
        %436 = vmatprep.subr.mxu0 0.0
        %437 = vmatpush1.msra.mxu0 0.0
        %438 = vmatprep.subr.mxu0 0.0
        %439 = vmatpush1.msra.mxu0 0.0
        %440 = vmatprep.subr.mxu0 0.0
        %441 = vmatpush1.msra.mxu0 0.0
        %442 = vmatprep.subr.mxu0 0.0
        %443 = vmatpush1.msra.mxu0 0.0
        %444 = vmatprep.subr.mxu0 0.0
        %445 = vmatpush1.msra.mxu0 0.0
        %446 = vmatprep.subr.mxu0 0.0
        %447 = vmatpush1.msra.mxu0 0.0
        %448 = vmatprep.subr.mxu0 0.0
        %449 = vmatpush1.msra.mxu0 %v342
        %450 = vmatprep.subr.mxu0 0.0
        %451 = vmatpush1.msra.mxu0 %v341
        %452 = vmatprep.subr.mxu0 0.0
        %453 = vmatpush1.msra.mxu0 %v340
        %454 = vmatprep.subr.mxu0 0.0
        %455 = vmatpush1.msra.mxu0 %v339
        %456 = vmatprep.subr.mxu0 0.0
        %457 = vmatpush2.msra.mxu0 0.0
        %458 = vmatprep.subr.mxu0 0.0
        %459 = vmatpush2.msra.mxu0 0.0
        %460 = vmatprep.subr.mxu0 0.0
        %461 = vmatpush2.msra.mxu0 0.0
        %462 = vmatprep.subr.mxu0 0.0
        %463 = vmatpush2.msra.mxu0 0.0
        %464 = vmatprep.subr.mxu0 0.0
        %465 = vmatpush2.msra.mxu0 0.0
        %466 = vmatprep.subr.mxu0 0.0
        %467 = vmatpush2.msra.mxu0 0.0
        %468 = vmatprep.subr.mxu0 0.0
        %469 = vmatpush2.msra.mxu0 0.0
        %470 = vmatprep.subr.mxu0 0.0
        %471 = vmatpush2.msra.mxu0 0.0
        %472 = vmatprep.subr.mxu0 0.0
        %473 = vmatpush2.msra.mxu0 0.0
        %474 = vmatprep.subr.mxu0 0.0
        %475 = vmatpush2.msra.mxu0 0.0
        %476 = vmatprep.subr.mxu0 0.0
        %477 = vmatpush2.msra.mxu0 0.0
        %478 = vmatprep.subr.mxu0 0.0
        %479 = vmatpush2.msra.mxu0 0.0
        %480 = vmatprep.subr.mxu0 0.0
        %481 = vmatpush2.msra.mxu0 0.0
        %482 = vmatprep.subr.mxu0 0.0
        %483 = vmatpush2.msra.mxu0 0.0
        %484 = vmatprep.subr.mxu0 0.0
        %485 = vmatpush2.msra.mxu0 0.0
        %486 = vmatprep.subr.mxu0 0.0
        %487 = vmatpush2.msra.mxu0 0.0
        %488 = vmatprep.mubr.f32.mxu0 0.0
        %489 = vmatmul.mubr.f32.gmra.mxu0 %v352
        %v490 = vpop.f32.mrf.mxu0
        %v491 = vadd.f32 0.0, %v490
        %v492 = vpop.f32.mrf.mxu0
        %493 = vdwg.mxu0
        %494 = vmatprep.subr.mxu0 0.0
        %495 = vmatpush1.msra.mxu0 0.0
        %496 = vmatprep.subr.mxu0 0.0
        %497 = vmatpush1.msra.mxu0 0.0
        %498 = vmatprep.subr.mxu0 0.0
        %499 = vmatpush1.msra.mxu0 0.0
        %500 = vmatprep.subr.mxu0 0.0
        %501 = vmatpush1.msra.mxu0 0.0
        %502 = vmatprep.subr.mxu0 0.0
        %503 = vmatpush1.msra.mxu0 0.0
        %504 = vmatprep.subr.mxu0 0.0
        %505 = vmatpush1.msra.mxu0 0.0
        %506 = vmatprep.subr.mxu0 0.0
        %507 = vmatpush1.msra.mxu0 0.0
        %508 = vmatprep.subr.mxu0 0.0
        %509 = vmatpush1.msra.mxu0 0.0
        %510 = vmatprep.subr.mxu0 0.0
        %511 = vmatpush1.msra.mxu0 0.0
        %512 = vmatprep.subr.mxu0 0.0
        %513 = vmatpush1.msra.mxu0 0.0
        %514 = vmatprep.subr.mxu0 0.0
        %515 = vmatpush1.msra.mxu0 0.0
        %516 = vmatprep.subr.mxu0 0.0
        %517 = vmatpush1.msra.mxu0 0.0
        %518 = vmatprep.subr.mxu0 0.0
        %519 = vmatpush1.msra.mxu0 %v346
        %520 = vmatprep.subr.mxu0 0.0
        %521 = vmatpush1.msra.mxu0 %v345
        %522 = vmatprep.subr.mxu0 0.0
        %523 = vmatpush1.msra.mxu0 %v344
        %524 = vmatprep.subr.mxu0 0.0
        %525 = vmatpush1.msra.mxu0 %v343
        %526 = vmatprep.subr.mxu0 0.0
        %527 = vmatpush2.msra.mxu0 0.0
        %528 = vmatprep.subr.mxu0 0.0
        %529 = vmatpush2.msra.mxu0 0.0
        %530 = vmatprep.subr.mxu0 0.0
        %531 = vmatpush2.msra.mxu0 0.0
        %532 = vmatprep.subr.mxu0 0.0
        %533 = vmatpush2.msra.mxu0 0.0
        %534 = vmatprep.subr.mxu0 0.0
        %535 = vmatpush2.msra.mxu0 0.0
        %536 = vmatprep.subr.mxu0 0.0
        %537 = vmatpush2.msra.mxu0 0.0
        %538 = vmatprep.subr.mxu0 0.0
        %539 = vmatpush2.msra.mxu0 0.0
        %540 = vmatprep.subr.mxu0 0.0
        %541 = vmatpush2.msra.mxu0 0.0
        %542 = vmatprep.subr.mxu0 0.0
        %543 = vmatpush2.msra.mxu0 0.0
        %544 = vmatprep.subr.mxu0 0.0
        %545 = vmatpush2.msra.mxu0 0.0
        %546 = vmatprep.subr.mxu0 0.0
        %547 = vmatpush2.msra.mxu0 0.0
        %548 = vmatprep.subr.mxu0 0.0
        %549 = vmatpush2.msra.mxu0 0.0
        %550 = vmatprep.subr.mxu0 0.0
        %551 = vmatpush2.msra.mxu0 0.0
        %552 = vmatprep.subr.mxu0 0.0
        %553 = vmatpush2.msra.mxu0 0.0
        %554 = vmatprep.subr.mxu0 0.0
        %555 = vmatpush2.msra.mxu0 0.0
        %556 = vmatprep.subr.mxu0 0.0
        %557 = vmatpush2.msra.mxu0 0.0
        %558 = vmatprep.mubr.f32.mxu0 0.0
        %559 = vmatmul.mubr.f32.gmra.mxu0 %v352
        %v560 = vpop.f32.mrf.mxu0
        %v561 = vadd.f32 0.0, %v560
        %v562 = vpop.f32.mrf.mxu0
        %563 = vdwg.mxu0
        %564 = vmatprep.subr.mxu0 0.0
        %565 = vmatpush1.msra.mxu0 0.0
        %566 = vmatprep.subr.mxu0 0.0
        %567 = vmatpush1.msra.mxu0 0.0
        %568 = vmatprep.subr.mxu0 0.0
        %569 = vmatpush1.msra.mxu0 0.0
        %570 = vmatprep.subr.mxu0 0.0
        %571 = vmatpush1.msra.mxu0 0.0
        %572 = vmatprep.subr.mxu0 0.0
        %573 = vmatpush1.msra.mxu0 0.0
        %574 = vmatprep.subr.mxu0 0.0
        %575 = vmatpush1.msra.mxu0 0.0
        %576 = vmatprep.subr.mxu0 0.0
        %577 = vmatpush1.msra.mxu0 0.0
        %578 = vmatprep.subr.mxu0 0.0
        %579 = vmatpush1.msra.mxu0 0.0
        %580 = vmatprep.subr.mxu0 0.0
        %581 = vmatpush1.msra.mxu0 0.0
        %582 = vmatprep.subr.mxu0 0.0
        %583 = vmatpush1.msra.mxu0 0.0
        %584 = vmatprep.subr.mxu0 0.0
        %585 = vmatpush1.msra.mxu0 0.0
        %586 = vmatprep.subr.mxu0 0.0
        %587 = vmatpush1.msra.mxu0 0.0
        %588 = vmatprep.subr.mxu0 0.0
        %589 = vmatpush1.msra.mxu0 %v350
        %590 = vmatprep.subr.mxu0 0.0
        %591 = vmatpush1.msra.mxu0 %v349
        %592 = vmatprep.subr.mxu0 0.0
        %593 = vmatpush1.msra.mxu0 %v348
        %594 = vmatprep.subr.mxu0 0.0
        %595 = vmatpush1.msra.mxu0 %v347
        %596 = vmatprep.subr.mxu0 0.0
        %597 = vmatpush2.msra.mxu0 0.0
        %598 = vmatprep.subr.mxu0 0.0
        %599 = vmatpush2.msra.mxu0 0.0
        %600 = vmatprep.subr.mxu0 0.0
        %601 = vmatpush2.msra.mxu0 0.0
        %602 = vmatprep.subr.mxu0 0.0
        %603 = vmatpush2.msra.mxu0 0.0
        %604 = vmatprep.subr.mxu0 0.0
        %605 = vmatpush2.msra.mxu0 0.0
        %606 = vmatprep.subr.mxu0 0.0
        %607 = vmatpush2.msra.mxu0 0.0
        %608 = vmatprep.subr.mxu0 0.0
        %609 = vmatpush2.msra.mxu0 0.0
        %610 = vmatprep.subr.mxu0 0.0
        %611 = vmatpush2.msra.mxu0 0.0
        %612 = vmatprep.subr.mxu0 0.0
        %613 = vmatpush2.msra.mxu0 0.0
        %614 = vmatprep.subr.mxu0 0.0
        %615 = vmatpush2.msra.mxu0 0.0
        %616 = vmatprep.subr.mxu0 0.0
        %617 = vmatpush2.msra.mxu0 0.0
        %618 = vmatprep.subr.mxu0 0.0
        %619 = vmatpush2.msra.mxu0 0.0
        %620 = vmatprep.subr.mxu0 0.0
        %621 = vmatpush2.msra.mxu0 0.0
        %622 = vmatprep.subr.mxu0 0.0
        %623 = vmatpush2.msra.mxu0 0.0
        %624 = vmatprep.subr.mxu0 0.0
        %625 = vmatpush2.msra.mxu0 0.0
        %626 = vmatprep.subr.mxu0 0.0
        %627 = vmatpush2.msra.mxu0 0.0
        %628 = vmatprep.mubr.f32.mxu0 0.0
        %629 = vmatmul.mubr.f32.gmra.mxu0 %v352
        %v630 = vpop.f32.mrf.mxu0
        %v631 = vadd.f32 0.0, %v630
        %v632 = vpop.f32.mrf.mxu0
        %633 = vdwg.mxu0
        %v634 = vld [vmem:[%s4] sm:$0xff]
        %v635 = vld [vmem:[%s4 + $0x8] sm:$0xff]
        %v636 = vld [vmem:[%s4 + $0x10] sm:$0xff]
        %v637 = vld [vmem:[%s4 + $0x18] sm:$0xff]
        %v638 = vld [vmem:[%s4 + $0x20] sm:$0xff]
        %v639 = vld [vmem:[%s4 + $0x28] sm:$0xff]
        %v640 = vld [vmem:[%s4 + $0x30] sm:$0xff]
        %v641 = vld [vmem:[%s4 + $0x38] sm:$0xff]
        %v642 = vld [vmem:[%s4 + $0x40] sm:$0xff]
        %v643 = vld [vmem:[%s4 + $0x48] sm:$0xff]
        %v644 = vld [vmem:[%s4 + $0x50] sm:$0xff]
        %v645 = vld [vmem:[%s4 + $0x58] sm:$0xff]
        %v646 = vld [vmem:[%s4 + $0x60] sm:$0xff]
        %v647 = vld [vmem:[%s4 + $0x68] sm:$0xff]
        %v648 = vld [vmem:[%s4 + $0x70] sm:$0xff]
        %v649 = vld [vmem:[%s4 + $0x78] sm:$0xff]
        %650 = vmatprep.subr.mxu0 0.0
        %651 = vmatpush1.msra.mxu0 0.0
        %652 = vmatprep.subr.mxu0 0.0
        %653 = vmatpush1.msra.mxu0 0.0
        %654 = vmatprep.subr.mxu0 0.0
        %655 = vmatpush1.msra.mxu0 0.0
        %656 = vmatprep.subr.mxu0 0.0
        %657 = vmatpush1.msra.mxu0 0.0
        %658 = vmatprep.subr.mxu0 0.0
        %659 = vmatpush1.msra.mxu0 0.0
        %660 = vmatprep.subr.mxu0 0.0
        %661 = vmatpush1.msra.mxu0 0.0
        %662 = vmatprep.subr.mxu0 0.0
        %663 = vmatpush1.msra.mxu0 0.0
        %664 = vmatprep.subr.mxu0 0.0
        %665 = vmatpush1.msra.mxu0 0.0
        %666 = vmatprep.subr.mxu0 0.0
        %667 = vmatpush1.msra.mxu0 0.0
        %668 = vmatprep.subr.mxu0 0.0
        %669 = vmatpush1.msra.mxu0 0.0
        %670 = vmatprep.subr.mxu0 0.0
        %671 = vmatpush1.msra.mxu0 0.0
        %672 = vmatprep.subr.mxu0 0.0
        %673 = vmatpush1.msra.mxu0 0.0
        %674 = vmatprep.subr.mxu0 0.0
        %675 = vmatpush1.msra.mxu0 %v637
        %676 = vmatprep.subr.mxu0 0.0
        %677 = vmatpush1.msra.mxu0 %v636
        %678 = vmatprep.subr.mxu0 0.0
        %679 = vmatpush1.msra.mxu0 %v635
        %680 = vmatprep.subr.mxu0 0.0
        %681 = vmatpush1.msra.mxu0 %v634
        %682 = vmatprep.subr.mxu0 0.0
        %683 = vmatpush2.msra.mxu0 0.0
        %684 = vmatprep.subr.mxu0 0.0
        %685 = vmatpush2.msra.mxu0 0.0
        %686 = vmatprep.subr.mxu0 0.0
        %687 = vmatpush2.msra.mxu0 0.0
        %688 = vmatprep.subr.mxu0 0.0
        %689 = vmatpush2.msra.mxu0 0.0
        %690 = vmatprep.subr.mxu0 0.0
        %691 = vmatpush2.msra.mxu0 0.0
        %692 = vmatprep.subr.mxu0 0.0
        %693 = vmatpush2.msra.mxu0 0.0
        %694 = vmatprep.subr.mxu0 0.0
        %695 = vmatpush2.msra.mxu0 0.0
        %696 = vmatprep.subr.mxu0 0.0
        %697 = vmatpush2.msra.mxu0 0.0
        %698 = vmatprep.subr.mxu0 0.0
        %699 = vmatpush2.msra.mxu0 0.0
        %700 = vmatprep.subr.mxu0 0.0
        %701 = vmatpush2.msra.mxu0 0.0
        %702 = vmatprep.subr.mxu0 0.0
        %703 = vmatpush2.msra.mxu0 0.0
        %704 = vmatprep.subr.mxu0 0.0
        %705 = vmatpush2.msra.mxu0 0.0
        %706 = vmatprep.subr.mxu0 0.0
        %707 = vmatpush2.msra.mxu0 0.0
        %708 = vmatprep.subr.mxu0 0.0
        %709 = vmatpush2.msra.mxu0 0.0
        %710 = vmatprep.subr.mxu0 0.0
        %711 = vmatpush2.msra.mxu0 0.0
        %712 = vmatprep.subr.mxu0 0.0
        %713 = vmatpush2.msra.mxu0 0.0
        %714 = vmatprep.mubr.f32.mxu0 0.0
        %715 = vmatmul.mubr.f32.gmra.mxu0 %v352
        %v716 = vpop.f32.mrf.mxu0
        %v717 = vadd.f32 0.0, %v716
        %v718 = vpop.f32.mrf.mxu0
        %719 = vdwg.mxu0
        %720 = vmatprep.subr.mxu0 0.0
        %721 = vmatpush1.msra.mxu0 0.0
        %722 = vmatprep.subr.mxu0 0.0
        %723 = vmatpush1.msra.mxu0 0.0
        %724 = vmatprep.subr.mxu0 0.0
        %725 = vmatpush1.msra.mxu0 0.0
        %726 = vmatprep.subr.mxu0 0.0
        %727 = vmatpush1.msra.mxu0 0.0
        %728 = vmatprep.subr.mxu0 0.0
        %729 = vmatpush1.msra.mxu0 0.0
        %730 = vmatprep.subr.mxu0 0.0
        %731 = vmatpush1.msra.mxu0 0.0
        %732 = vmatprep.subr.mxu0 0.0
        %733 = vmatpush1.msra.mxu0 0.0
        %734 = vmatprep.subr.mxu0 0.0
        %735 = vmatpush1.msra.mxu0 0.0
        %736 = vmatprep.subr.mxu0 0.0
        %737 = vmatpush1.msra.mxu0 0.0
        %738 = vmatprep.subr.mxu0 0.0
        %739 = vmatpush1.msra.mxu0 0.0
        %740 = vmatprep.subr.mxu0 0.0
        %741 = vmatpush1.msra.mxu0 0.0
        %742 = vmatprep.subr.mxu0 0.0
        %743 = vmatpush1.msra.mxu0 0.0
        %744 = vmatprep.subr.mxu0 0.0
        %745 = vmatpush1.msra.mxu0 %v641
        %746 = vmatprep.subr.mxu0 0.0
        %747 = vmatpush1.msra.mxu0 %v640
        %748 = vmatprep.subr.mxu0 0.0
        %749 = vmatpush1.msra.mxu0 %v639
        %750 = vmatprep.subr.mxu0 0.0
        %751 = vmatpush1.msra.mxu0 %v638
        %752 = vmatprep.subr.mxu0 0.0
        %753 = vmatpush2.msra.mxu0 0.0
        %754 = vmatprep.subr.mxu0 0.0
        %755 = vmatpush2.msra.mxu0 0.0
        %756 = vmatprep.subr.mxu0 0.0
        %757 = vmatpush2.msra.mxu0 0.0
        %758 = vmatprep.subr.mxu0 0.0
        %759 = vmatpush2.msra.mxu0 0.0
        %760 = vmatprep.subr.mxu0 0.0
        %761 = vmatpush2.msra.mxu0 0.0
        %762 = vmatprep.subr.mxu0 0.0
        %763 = vmatpush2.msra.mxu0 0.0
        %764 = vmatprep.subr.mxu0 0.0
        %765 = vmatpush2.msra.mxu0 0.0
        %766 = vmatprep.subr.mxu0 0.0
        %767 = vmatpush2.msra.mxu0 0.0
        %768 = vmatprep.subr.mxu0 0.0
        %769 = vmatpush2.msra.mxu0 0.0
        %770 = vmatprep.subr.mxu0 0.0
        %771 = vmatpush2.msra.mxu0 0.0
        %772 = vmatprep.subr.mxu0 0.0
        %773 = vmatpush2.msra.mxu0 0.0
        %774 = vmatprep.subr.mxu0 0.0
        %775 = vmatpush2.msra.mxu0 0.0
        %776 = vmatprep.subr.mxu0 0.0
        %777 = vmatpush2.msra.mxu0 0.0
        %778 = vmatprep.subr.mxu0 0.0
        %779 = vmatpush2.msra.mxu0 0.0
        %780 = vmatprep.subr.mxu0 0.0
        %781 = vmatpush2.msra.mxu0 0.0
        %782 = vmatprep.subr.mxu0 0.0
        %783 = vmatpush2.msra.mxu0 0.0
        %784 = vmatprep.mubr.f32.mxu0 0.0
        %785 = vmatmul.mubr.f32.gmra.mxu0 %v352
        %v786 = vpop.f32.mrf.mxu0
        %v787 = vadd.f32 0.0, %v786
        %v788 = vpop.f32.mrf.mxu0
        %789 = vdwg.mxu0
        %790 = vmatprep.subr.mxu0 0.0
        %791 = vmatpush1.msra.mxu0 0.0
        %792 = vmatprep.subr.mxu0 0.0
        %793 = vmatpush1.msra.mxu0 0.0
        %794 = vmatprep.subr.mxu0 0.0
        %795 = vmatpush1.msra.mxu0 0.0
        %796 = vmatprep.subr.mxu0 0.0
        %797 = vmatpush1.msra.mxu0 0.0
        %798 = vmatprep.subr.mxu0 0.0
        %799 = vmatpush1.msra.mxu0 0.0
        %800 = vmatprep.subr.mxu0 0.0
        %801 = vmatpush1.msra.mxu0 0.0
        %802 = vmatprep.subr.mxu0 0.0
        %803 = vmatpush1.msra.mxu0 0.0
        %804 = vmatprep.subr.mxu0 0.0
        %805 = vmatpush1.msra.mxu0 0.0
        %806 = vmatprep.subr.mxu0 0.0
        %807 = vmatpush1.msra.mxu0 0.0
        %808 = vmatprep.subr.mxu0 0.0
        %809 = vmatpush1.msra.mxu0 0.0
        %810 = vmatprep.subr.mxu0 0.0
        %811 = vmatpush1.msra.mxu0 0.0
        %812 = vmatprep.subr.mxu0 0.0
        %813 = vmatpush1.msra.mxu0 0.0
        %814 = vmatprep.subr.mxu0 0.0
        %815 = vmatpush1.msra.mxu0 %v645
        %816 = vmatprep.subr.mxu0 0.0
        %817 = vmatpush1.msra.mxu0 %v644
        %818 = vmatprep.subr.mxu0 0.0
        %819 = vmatpush1.msra.mxu0 %v643
        %820 = vmatprep.subr.mxu0 0.0
        %821 = vmatpush1.msra.mxu0 %v642
        %822 = vmatprep.subr.mxu0 0.0
        %823 = vmatpush2.msra.mxu0 0.0
        %824 = vmatprep.subr.mxu0 0.0
        %825 = vmatpush2.msra.mxu0 0.0
        %826 = vmatprep.subr.mxu0 0.0
        %827 = vmatpush2.msra.mxu0 0.0
        %828 = vmatprep.subr.mxu0 0.0
        %829 = vmatpush2.msra.mxu0 0.0
        %830 = vmatprep.subr.mxu0 0.0
        %831 = vmatpush2.msra.mxu0 0.0
        %832 = vmatprep.subr.mxu0 0.0
        %833 = vmatpush2.msra.mxu0 0.0
        %834 = vmatprep.subr.mxu0 0.0
        %835 = vmatpush2.msra.mxu0 0.0
        %836 = vmatprep.subr.mxu0 0.0
        %837 = vmatpush2.msra.mxu0 0.0
        %838 = vmatprep.subr.mxu0 0.0
        %839 = vmatpush2.msra.mxu0 0.0
        %840 = vmatprep.subr.mxu0 0.0
        %841 = vmatpush2.msra.mxu0 0.0
        %842 = vmatprep.subr.mxu0 0.0
        %843 = vmatpush2.msra.mxu0 0.0
        %844 = vmatprep.subr.mxu0 0.0
        %845 = vmatpush2.msra.mxu0 0.0
        %846 = vmatprep.subr.mxu0 0.0
        %847 = vmatpush2.msra.mxu0 0.0
        %848 = vmatprep.subr.mxu0 0.0
        %849 = vmatpush2.msra.mxu0 0.0
        %850 = vmatprep.subr.mxu0 0.0
        %851 = vmatpush2.msra.mxu0 0.0
        %852 = vmatprep.subr.mxu0 0.0
        %853 = vmatpush2.msra.mxu0 0.0
        %854 = vmatprep.mubr.f32.mxu0 0.0
        %855 = vmatmul.mubr.f32.gmra.mxu0 %v352
        %v856 = vpop.f32.mrf.mxu0
        %v857 = vadd.f32 0.0, %v856
        %v858 = vpop.f32.mrf.mxu0
        %859 = vdwg.mxu0
        %860 = vmatprep.subr.mxu0 0.0
        %861 = vmatpush1.msra.mxu0 0.0
        %862 = vmatprep.subr.mxu0 0.0
        %863 = vmatpush1.msra.mxu0 0.0
        %864 = vmatprep.subr.mxu0 0.0
        %865 = vmatpush1.msra.mxu0 0.0
        %866 = vmatprep.subr.mxu0 0.0
        %867 = vmatpush1.msra.mxu0 0.0
        %868 = vmatprep.subr.mxu0 0.0
        %869 = vmatpush1.msra.mxu0 0.0
        %870 = vmatprep.subr.mxu0 0.0
        %871 = vmatpush1.msra.mxu0 0.0
        %872 = vmatprep.subr.mxu0 0.0
        %873 = vmatpush1.msra.mxu0 0.0
        %874 = vmatprep.subr.mxu0 0.0
        %875 = vmatpush1.msra.mxu0 0.0
        %876 = vmatprep.subr.mxu0 0.0
        %877 = vmatpush1.msra.mxu0 0.0
        %878 = vmatprep.subr.mxu0 0.0
        %879 = vmatpush1.msra.mxu0 0.0
        %880 = vmatprep.subr.mxu0 0.0
        %881 = vmatpush1.msra.mxu0 0.0
        %882 = vmatprep.subr.mxu0 0.0
        %883 = vmatpush1.msra.mxu0 0.0
        %884 = vmatprep.subr.mxu0 0.0
        %885 = vmatpush1.msra.mxu0 %v649
        %886 = vmatprep.subr.mxu0 0.0
        %887 = vmatpush1.msra.mxu0 %v648
        %888 = vmatprep.subr.mxu0 0.0
        %889 = vmatpush1.msra.mxu0 %v647
        %890 = vmatprep.subr.mxu0 0.0
        %891 = vmatpush1.msra.mxu0 %v646
        %892 = vmatprep.subr.mxu0 0.0
        %893 = vmatpush2.msra.mxu0 0.0
        %894 = vmatprep.subr.mxu0 0.0
        %895 = vmatpush2.msra.mxu0 0.0
        %896 = vmatprep.subr.mxu0 0.0
        %897 = vmatpush2.msra.mxu0 0.0
        %898 = vmatprep.subr.mxu0 0.0
        %899 = vmatpush2.msra.mxu0 0.0
        %900 = vmatprep.subr.mxu0 0.0
        %901 = vmatpush2.msra.mxu0 0.0
        %902 = vmatprep.subr.mxu0 0.0
        %903 = vmatpush2.msra.mxu0 0.0
        %904 = vmatprep.subr.mxu0 0.0
        %905 = vmatpush2.msra.mxu0 0.0
        %906 = vmatprep.subr.mxu0 0.0
        %907 = vmatpush2.msra.mxu0 0.0
        %908 = vmatprep.subr.mxu0 0.0
        %909 = vmatpush2.msra.mxu0 0.0
        %910 = vmatprep.subr.mxu0 0.0
        %911 = vmatpush2.msra.mxu0 0.0
        %912 = vmatprep.subr.mxu0 0.0
        %913 = vmatpush2.msra.mxu0 0.0
        %914 = vmatprep.subr.mxu0 0.0
        %915 = vmatpush2.msra.mxu0 0.0
        %916 = vmatprep.subr.mxu0 0.0
        %917 = vmatpush2.msra.mxu0 0.0
        %918 = vmatprep.subr.mxu0 0.0
        %919 = vmatpush2.msra.mxu0 0.0
        %920 = vmatprep.subr.mxu0 0.0
        %921 = vmatpush2.msra.mxu0 0.0
        %922 = vmatprep.subr.mxu0 0.0
        %923 = vmatpush2.msra.mxu0 0.0
        %924 = vmatprep.mubr.f32.mxu0 0.0
        %925 = vmatmul.mubr.f32.gmra.mxu0 %v352
        %v926 = vpop.f32.mrf.mxu0
        %v927 = vadd.f32 0.0, %v926
        %v928 = vpop.f32.mrf.mxu0
        %929 = vdwg.mxu0
        %v930 = vld [vmem:[%s5] sm:$0xff]
        %v931 = vld [vmem:[%s5 + $0x8] sm:$0xff]
        %v932 = vld [vmem:[%s5 + $0x10] sm:$0xff]
        %v933 = vld [vmem:[%s5 + $0x18] sm:$0xff]
        %v934 = vld [vmem:[%s5 + $0x20] sm:$0xff]
        %v935 = vld [vmem:[%s5 + $0x28] sm:$0xff]
        %v936 = vld [vmem:[%s5 + $0x30] sm:$0xff]
        %v937 = vld [vmem:[%s5 + $0x38] sm:$0xff]
        %v938 = vld [vmem:[%s5 + $0x40] sm:$0xff]
        %v939 = vld [vmem:[%s5 + $0x48] sm:$0xff]
        %v940 = vld [vmem:[%s5 + $0x50] sm:$0xff]
        %v941 = vld [vmem:[%s5 + $0x58] sm:$0xff]
        %v942 = vld [vmem:[%s5 + $0x60] sm:$0xff]
        %v943 = vld [vmem:[%s5 + $0x68] sm:$0xff]
        %v944 = vld [vmem:[%s5 + $0x70] sm:$0xff]
        %v945 = vld [vmem:[%s5 + $0x78] sm:$0xff]
        %946 = vmatprep.subr.mxu0 0.0
        %947 = vmatpush1.msra.mxu0 0.0
        %948 = vmatprep.subr.mxu0 0.0
        %949 = vmatpush1.msra.mxu0 0.0
        %950 = vmatprep.subr.mxu0 0.0
        %951 = vmatpush1.msra.mxu0 0.0
        %952 = vmatprep.subr.mxu0 0.0
        %953 = vmatpush1.msra.mxu0 0.0
        %954 = vmatprep.subr.mxu0 0.0
        %955 = vmatpush1.msra.mxu0 0.0
        %956 = vmatprep.subr.mxu0 0.0
        %957 = vmatpush1.msra.mxu0 0.0
        %958 = vmatprep.subr.mxu0 0.0
        %959 = vmatpush1.msra.mxu0 0.0
        %960 = vmatprep.subr.mxu0 0.0
        %961 = vmatpush1.msra.mxu0 0.0
        %962 = vmatprep.subr.mxu0 0.0
        %963 = vmatpush1.msra.mxu0 0.0
        %964 = vmatprep.subr.mxu0 0.0
        %965 = vmatpush1.msra.mxu0 0.0
        %966 = vmatprep.subr.mxu0 0.0
        %967 = vmatpush1.msra.mxu0 0.0
        %968 = vmatprep.subr.mxu0 0.0
        %969 = vmatpush1.msra.mxu0 0.0
        %970 = vmatprep.subr.mxu0 0.0
        %971 = vmatpush1.msra.mxu0 %v933
        %972 = vmatprep.subr.mxu0 0.0
        %973 = vmatpush1.msra.mxu0 %v932
        %974 = vmatprep.subr.mxu0 0.0
        %975 = vmatpush1.msra.mxu0 %v931
        %976 = vmatprep.subr.mxu0 0.0
        %977 = vmatpush1.msra.mxu0 %v930
        %978 = vmatprep.subr.mxu0 0.0
        %979 = vmatpush2.msra.mxu0 0.0
        %980 = vmatprep.subr.mxu0 0.0
        %981 = vmatpush2.msra.mxu0 0.0
        %982 = vmatprep.subr.mxu0 0.0
        %983 = vmatpush2.msra.mxu0 0.0
        %984 = vmatprep.subr.mxu0 0.0
        %985 = vmatpush2.msra.mxu0 0.0
        %986 = vmatprep.subr.mxu0 0.0
        %987 = vmatpush2.msra.mxu0 0.0
        %988 = vmatprep.subr.mxu0 0.0
        %989 = vmatpush2.msra.mxu0 0.0
        %990 = vmatprep.subr.mxu0 0.0
        %991 = vmatpush2.msra.mxu0 0.0
        %992 = vmatprep.subr.mxu0 0.0
        %993 = vmatpush2.msra.mxu0 0.0
        %994 = vmatprep.subr.mxu0 0.0
        %995 = vmatpush2.msra.mxu0 0.0
        %996 = vmatprep.subr.mxu0 0.0
        %997 = vmatpush2.msra.mxu0 0.0
        %998 = vmatprep.subr.mxu0 0.0
        %999 = vmatpush2.msra.mxu0 0.0
        %1000 = vmatprep.subr.mxu0 0.0
        %1001 = vmatpush2.msra.mxu0 0.0
        %1002 = vmatprep.subr.mxu0 0.0
        %1003 = vmatpush2.msra.mxu0 0.0
        %1004 = vmatprep.subr.mxu0 0.0
        %1005 = vmatpush2.msra.mxu0 0.0
        %1006 = vmatprep.subr.mxu0 0.0
        %1007 = vmatpush2.msra.mxu0 0.0
        %1008 = vmatprep.subr.mxu0 0.0
        %1009 = vmatpush2.msra.mxu0 0.0
        %1010 = vmatprep.mubr.f32.mxu0 0.0
        %1011 = vmatmul.mubr.f32.gmra.mxu0 %v352
        %v1012 = vpop.f32.mrf.mxu0
        %v1013 = vadd.f32 0.0, %v1012
        %v1014 = vpop.f32.mrf.mxu0
        %1015 = vdwg.mxu0
        %1016 = vmatprep.subr.mxu0 0.0
        %1017 = vmatpush1.msra.mxu0 0.0
        %1018 = vmatprep.subr.mxu0 0.0
        %1019 = vmatpush1.msra.mxu0 0.0
        %1020 = vmatprep.subr.mxu0 0.0
        %1021 = vmatpush1.msra.mxu0 0.0
        %1022 = vmatprep.subr.mxu0 0.0
        %1023 = vmatpush1.msra.mxu0 0.0
        %1024 = vmatprep.subr.mxu0 0.0
        %1025 = vmatpush1.msra.mxu0 0.0
        %1026 = vmatprep.subr.mxu0 0.0
        %1027 = vmatpush1.msra.mxu0 0.0
        %1028 = vmatprep.subr.mxu0 0.0
        %1029 = vmatpush1.msra.mxu0 0.0
        %1030 = vmatprep.subr.mxu0 0.0
        %1031 = vmatpush1.msra.mxu0 0.0
        %1032 = vmatprep.subr.mxu0 0.0
        %1033 = vmatpush1.msra.mxu0 0.0
        %1034 = vmatprep.subr.mxu0 0.0
        %1035 = vmatpush1.msra.mxu0 0.0
        %1036 = vmatprep.subr.mxu0 0.0
        %1037 = vmatpush1.msra.mxu0 0.0
        %1038 = vmatprep.subr.mxu0 0.0
        %1039 = vmatpush1.msra.mxu0 0.0
        %1040 = vmatprep.subr.mxu0 0.0
        %1041 = vmatpush1.msra.mxu0 %v937
        %1042 = vmatprep.subr.mxu0 0.0
        %1043 = vmatpush1.msra.mxu0 %v936
        %1044 = vmatprep.subr.mxu0 0.0
        %1045 = vmatpush1.msra.mxu0 %v935
        %1046 = vmatprep.subr.mxu0 0.0
        %1047 = vmatpush1.msra.mxu0 %v934
        %1048 = vmatprep.subr.mxu0 0.0
        %1049 = vmatpush2.msra.mxu0 0.0
        %1050 = vmatprep.subr.mxu0 0.0
        %1051 = vmatpush2.msra.mxu0 0.0
        %1052 = vmatprep.subr.mxu0 0.0
        %1053 = vmatpush2.msra.mxu0 0.0
        %1054 = vmatprep.subr.mxu0 0.0
        %1055 = vmatpush2.msra.mxu0 0.0
        %1056 = vmatprep.subr.mxu0 0.0
        %1057 = vmatpush2.msra.mxu0 0.0
        %1058 = vmatprep.subr.mxu0 0.0
        %1059 = vmatpush2.msra.mxu0 0.0
        %1060 = vmatprep.subr.mxu0 0.0
        %1061 = vmatpush2.msra.mxu0 0.0
        %1062 = vmatprep.subr.mxu0 0.0
        %1063 = vmatpush2.msra.mxu0 0.0
        %1064 = vmatprep.subr.mxu0 0.0
        %1065 = vmatpush2.msra.mxu0 0.0
        %1066 = vmatprep.subr.mxu0 0.0
        %1067 = vmatpush2.msra.mxu0 0.0
        %1068 = vmatprep.subr.mxu0 0.0
        %1069 = vmatpush2.msra.mxu0 0.0
        %1070 = vmatprep.subr.mxu0 0.0
        %1071 = vmatpush2.msra.mxu0 0.0
        %1072 = vmatprep.subr.mxu0 0.0
        %1073 = vmatpush2.msra.mxu0 0.0
        %1074 = vmatprep.subr.mxu0 0.0
        %1075 = vmatpush2.msra.mxu0 0.0
        %1076 = vmatprep.subr.mxu0 0.0
        %1077 = vmatpush2.msra.mxu0 0.0
        %1078 = vmatprep.subr.mxu0 0.0
        %1079 = vmatpush2.msra.mxu0 0.0
        %1080 = vmatprep.mubr.f32.mxu0 0.0
        %1081 = vmatmul.mubr.f32.gmra.mxu0 %v352
        %v1082 = vpop.f32.mrf.mxu0
        %v1083 = vadd.f32 0.0, %v1082
        %v1084 = vpop.f32.mrf.mxu0
        %1085 = vdwg.mxu0
        %1086 = vmatprep.subr.mxu0 0.0
        %1087 = vmatpush1.msra.mxu0 0.0
        %1088 = vmatprep.subr.mxu0 0.0
        %1089 = vmatpush1.msra.mxu0 0.0
        %1090 = vmatprep.subr.mxu0 0.0
        %1091 = vmatpush1.msra.mxu0 0.0
        %1092 = vmatprep.subr.mxu0 0.0
        %1093 = vmatpush1.msra.mxu0 0.0
        %1094 = vmatprep.subr.mxu0 0.0
        %1095 = vmatpush1.msra.mxu0 0.0
        %1096 = vmatprep.subr.mxu0 0.0
        %1097 = vmatpush1.msra.mxu0 0.0
        %1098 = vmatprep.subr.mxu0 0.0
        %1099 = vmatpush1.msra.mxu0 0.0
        %1100 = vmatprep.subr.mxu0 0.0
        %1101 = vmatpush1.msra.mxu0 0.0
        %1102 = vmatprep.subr.mxu0 0.0
        %1103 = vmatpush1.msra.mxu0 0.0
        %1104 = vmatprep.subr.mxu0 0.0
        %1105 = vmatpush1.msra.mxu0 0.0
        %1106 = vmatprep.subr.mxu0 0.0
        %1107 = vmatpush1.msra.mxu0 0.0
        %1108 = vmatprep.subr.mxu0 0.0
        %1109 = vmatpush1.msra.mxu0 0.0
        %1110 = vmatprep.subr.mxu0 0.0
        %1111 = vmatpush1.msra.mxu0 %v941
        %1112 = vmatprep.subr.mxu0 0.0
        %1113 = vmatpush1.msra.mxu0 %v940
        %1114 = vmatprep.subr.mxu0 0.0
        %1115 = vmatpush1.msra.mxu0 %v939
        %1116 = vmatprep.subr.mxu0 0.0
        %1117 = vmatpush1.msra.mxu0 %v938
        %1118 = vmatprep.subr.mxu0 0.0
        %1119 = vmatpush2.msra.mxu0 0.0
        %1120 = vmatprep.subr.mxu0 0.0
        %1121 = vmatpush2.msra.mxu0 0.0
        %1122 = vmatprep.subr.mxu0 0.0
        %1123 = vmatpush2.msra.mxu0 0.0
        %1124 = vmatprep.subr.mxu0 0.0
        %1125 = vmatpush2.msra.mxu0 0.0
        %1126 = vmatprep.subr.mxu0 0.0
        %1127 = vmatpush2.msra.mxu0 0.0
        %1128 = vmatprep.subr.mxu0 0.0
        %1129 = vmatpush2.msra.mxu0 0.0
        %1130 = vmatprep.subr.mxu0 0.0
        %1131 = vmatpush2.msra.mxu0 0.0
        %1132 = vmatprep.subr.mxu0 0.0
        %1133 = vmatpush2.msra.mxu0 0.0
        %1134 = vmatprep.subr.mxu0 0.0
        %1135 = vmatpush2.msra.mxu0 0.0
        %1136 = vmatprep.subr.mxu0 0.0
        %1137 = vmatpush2.msra.mxu0 0.0
        %1138 = vmatprep.subr.mxu0 0.0
        %1139 = vmatpush2.msra.mxu0 0.0
        %1140 = vmatprep.subr.mxu0 0.0
        %1141 = vmatpush2.msra.mxu0 0.0
        %1142 = vmatprep.subr.mxu0 0.0
        %1143 = vmatpush2.msra.mxu0 0.0
        %1144 = vmatprep.subr.mxu0 0.0
        %1145 = vmatpush2.msra.mxu0 0.0
        %1146 = vmatprep.subr.mxu0 0.0
        %1147 = vmatpush2.msra.mxu0 0.0
        %1148 = vmatprep.subr.mxu0 0.0
        %1149 = vmatpush2.msra.mxu0 0.0
        %1150 = vmatprep.mubr.f32.mxu0 0.0
        %1151 = vmatmul.mubr.f32.gmra.mxu0 %v352
        %v1152 = vpop.f32.mrf.mxu0
        %v1153 = vadd.f32 0.0, %v1152
        %v1154 = vpop.f32.mrf.mxu0
        %1155 = vdwg.mxu0
        %1156 = vmatprep.subr.mxu0 0.0
        %1157 = vmatpush1.msra.mxu0 0.0
        %1158 = vmatprep.subr.mxu0 0.0
        %1159 = vmatpush1.msra.mxu0 0.0
        %1160 = vmatprep.subr.mxu0 0.0
        %1161 = vmatpush1.msra.mxu0 0.0
        %1162 = vmatprep.subr.mxu0 0.0
        %1163 = vmatpush1.msra.mxu0 0.0
        %1164 = vmatprep.subr.mxu0 0.0
        %1165 = vmatpush1.msra.mxu0 0.0
        %1166 = vmatprep.subr.mxu0 0.0
        %1167 = vmatpush1.msra.mxu0 0.0
        %1168 = vmatprep.subr.mxu0 0.0
        %1169 = vmatpush1.msra.mxu0 0.0
        %1170 = vmatprep.subr.mxu0 0.0
        %1171 = vmatpush1.msra.mxu0 0.0
        %1172 = vmatprep.subr.mxu0 0.0
        %1173 = vmatpush1.msra.mxu0 0.0
        %1174 = vmatprep.subr.mxu0 0.0
        %1175 = vmatpush1.msra.mxu0 0.0
        %1176 = vmatprep.subr.mxu0 0.0
        %1177 = vmatpush1.msra.mxu0 0.0
        %1178 = vmatprep.subr.mxu0 0.0
        %1179 = vmatpush1.msra.mxu0 0.0
        %1180 = vmatprep.subr.mxu0 0.0
        %1181 = vmatpush1.msra.mxu0 %v945
        %1182 = vmatprep.subr.mxu0 0.0
        %1183 = vmatpush1.msra.mxu0 %v944
        %1184 = vmatprep.subr.mxu0 0.0
        %1185 = vmatpush1.msra.mxu0 %v943
        %1186 = vmatprep.subr.mxu0 0.0
        %1187 = vmatpush1.msra.mxu0 %v942
        %1188 = vmatprep.subr.mxu0 0.0
        %1189 = vmatpush2.msra.mxu0 0.0
        %1190 = vmatprep.subr.mxu0 0.0
        %1191 = vmatpush2.msra.mxu0 0.0
        %1192 = vmatprep.subr.mxu0 0.0
        %1193 = vmatpush2.msra.mxu0 0.0
        %1194 = vmatprep.subr.mxu0 0.0
        %1195 = vmatpush2.msra.mxu0 0.0
        %1196 = vmatprep.subr.mxu0 0.0
        %1197 = vmatpush2.msra.mxu0 0.0
        %1198 = vmatprep.subr.mxu0 0.0
        %1199 = vmatpush2.msra.mxu0 0.0
        %1200 = vmatprep.subr.mxu0 0.0
        %1201 = vmatpush2.msra.mxu0 0.0
        %1202 = vmatprep.subr.mxu0 0.0
        %1203 = vmatpush2.msra.mxu0 0.0
        %1204 = vmatprep.subr.mxu0 0.0
        %1205 = vmatpush2.msra.mxu0 0.0
        %1206 = vmatprep.subr.mxu0 0.0
        %1207 = vmatpush2.msra.mxu0 0.0
        %1208 = vmatprep.subr.mxu0 0.0
        %1209 = vmatpush2.msra.mxu0 0.0
        %1210 = vmatprep.subr.mxu0 0.0
        %1211 = vmatpush2.msra.mxu0 0.0
        %1212 = vmatprep.subr.mxu0 0.0
        %1213 = vmatpush2.msra.mxu0 0.0
        %1214 = vmatprep.subr.mxu0 0.0
        %1215 = vmatpush2.msra.mxu0 0.0
        %1216 = vmatprep.subr.mxu0 0.0
        %1217 = vmatpush2.msra.mxu0 0.0
        %1218 = vmatprep.subr.mxu0 0.0
        %1219 = vmatpush2.msra.mxu0 0.0
        %1220 = vmatprep.mubr.f32.mxu0 0.0
        %1221 = vmatmul.mubr.f32.gmra.mxu0 %v352
        %v1222 = vpop.f32.mrf.mxu0
        %v1223 = vadd.f32 0.0, %v1222
        %v1224 = vpop.f32.mrf.mxu0
        %1225 = vdwg.mxu0
        %vm1226 = vcmask 130048
        %v1228 = vsel %vm1226, %v421, 0
        %v1231 = vsel %vm1226, %v717, 0
        %1233 = vmatprep.subr.mxu0 0.0
        %1234 = vmatpush1.xpose.msra.mxu0 0.0
        %1235 = vmatprep.subr.mxu0 0.0
        %1236 = vmatpush1.xpose.msra.mxu0 0.0
        %1237 = vmatprep.subr.mxu0 0.0
        %1238 = vmatpush1.xpose.msra.mxu0 0.0
        %1239 = vmatprep.subr.mxu0 0.0
        %1240 = vmatpush1.xpose.msra.mxu0 0.0
        %1241 = vmatprep.subr.mxu0 0.0
        %1242 = vmatpush1.xpose.msra.mxu0 0.0
        %1243 = vmatprep.subr.mxu0 0.0
        %1244 = vmatpush1.xpose.msra.mxu0 0.0
        %1245 = vmatprep.subr.mxu0 0.0
        %1246 = vmatpush1.xpose.msra.mxu0 0.0
        %1247 = vmatprep.subr.mxu0 0.0
        %1248 = vmatpush1.xpose.msra.mxu0 0.0
        %1249 = vmatprep.subr.mxu0 0.0
        %1250 = vmatpush1.xpose.msra.mxu0 0.0
        %1251 = vmatprep.subr.mxu0 0.0
        %1252 = vmatpush1.xpose.msra.mxu0 0.0
        %1253 = vmatprep.subr.mxu0 0.0
        %1254 = vmatpush1.xpose.msra.mxu0 0.0
        %1255 = vmatprep.subr.mxu0 0.0
        %1256 = vmatpush1.xpose.msra.mxu0 0.0
        %1257 = vmatprep.subr.mxu0 0.0
        %1258 = vmatpush1.xpose.msra.mxu0 0.0
        %1259 = vmatprep.subr.mxu0 0.0
        %1260 = vmatpush1.xpose.msra.mxu0 0.0
        %1261 = vmatprep.subr.mxu0 0.0
        %1262 = vmatpush1.xpose.msra.mxu0 0.0
        %1263 = vmatprep.subr.mxu0 0.0
        %1264 = vmatpush1.xpose.msra.mxu0 %v1231
        %1265 = vmatprep.subr.mxu0 0.0
        %1266 = vmatpush2.xpose.msra.mxu0 0.0
        %1267 = vmatprep.subr.mxu0 0.0
        %1268 = vmatpush2.xpose.msra.mxu0 0.0
        %1269 = vmatprep.subr.mxu0 0.0
        %1270 = vmatpush2.xpose.msra.mxu0 0.0
        %1271 = vmatprep.subr.mxu0 0.0
        %1272 = vmatpush2.xpose.msra.mxu0 0.0
        %1273 = vmatprep.subr.mxu0 0.0
        %1274 = vmatpush2.xpose.msra.mxu0 0.0
        %1275 = vmatprep.subr.mxu0 0.0
        %1276 = vmatpush2.xpose.msra.mxu0 0.0
        %1277 = vmatprep.subr.mxu0 0.0
        %1278 = vmatpush2.xpose.msra.mxu0 0.0
        %1279 = vmatprep.subr.mxu0 0.0
        %1280 = vmatpush2.xpose.msra.mxu0 0.0
        %1281 = vmatprep.subr.mxu0 0.0
        %1282 = vmatpush2.xpose.msra.mxu0 0.0
        %1283 = vmatprep.subr.mxu0 0.0
        %1284 = vmatpush2.xpose.msra.mxu0 0.0
        %1285 = vmatprep.subr.mxu0 0.0
        %1286 = vmatpush2.xpose.msra.mxu0 0.0
        %1287 = vmatprep.subr.mxu0 0.0
        %1288 = vmatpush2.xpose.msra.mxu0 0.0
        %1289 = vmatprep.subr.mxu0 0.0
        %1290 = vmatpush2.xpose.msra.mxu0 0.0
        %1291 = vmatprep.subr.mxu0 0.0
        %1292 = vmatpush2.xpose.msra.mxu0 0.0
        %1293 = vmatprep.subr.mxu0 0.0
        %1294 = vmatpush2.xpose.msra.mxu0 0.0
        %1295 = vmatprep.subr.mxu0 0.0
        %1296 = vmatpush2.xpose.msra.mxu0 0.0
        %1297 = vmatprep.mubr.f32.mxu0 0.0
        %1298 = vmatmul.mubr.f32.gmra.mxu0 %v1228
        %v1299 = vpop.f32.mrf.mxu0
        %v1300 = vadd.f32 0.0, %v1299
        %v1301 = vpop.f32.mrf.mxu0
        %1302 = vdwg.mxu0
        %v1304 = vsel %vm1226, %v491, 0
        %v1307 = vsel %vm1226, %v787, 0
        %1309 = vmatprep.subr.mxu0 0.0
        %1310 = vmatpush1.xpose.msra.mxu0 0.0
        %1311 = vmatprep.subr.mxu0 0.0
        %1312 = vmatpush1.xpose.msra.mxu0 0.0
        %1313 = vmatprep.subr.mxu0 0.0
        %1314 = vmatpush1.xpose.msra.mxu0 0.0
        %1315 = vmatprep.subr.mxu0 0.0
        %1316 = vmatpush1.xpose.msra.mxu0 0.0
        %1317 = vmatprep.subr.mxu0 0.0
        %1318 = vmatpush1.xpose.msra.mxu0 0.0
        %1319 = vmatprep.subr.mxu0 0.0
        %1320 = vmatpush1.xpose.msra.mxu0 0.0
        %1321 = vmatprep.subr.mxu0 0.0
        %1322 = vmatpush1.xpose.msra.mxu0 0.0
        %1323 = vmatprep.subr.mxu0 0.0
        %1324 = vmatpush1.xpose.msra.mxu0 0.0
        %1325 = vmatprep.subr.mxu0 0.0
        %1326 = vmatpush1.xpose.msra.mxu0 0.0
        %1327 = vmatprep.subr.mxu0 0.0
        %1328 = vmatpush1.xpose.msra.mxu0 0.0
        %1329 = vmatprep.subr.mxu0 0.0
        %1330 = vmatpush1.xpose.msra.mxu0 0.0
        %1331 = vmatprep.subr.mxu0 0.0
        %1332 = vmatpush1.xpose.msra.mxu0 0.0
        %1333 = vmatprep.subr.mxu0 0.0
        %1334 = vmatpush1.xpose.msra.mxu0 0.0
        %1335 = vmatprep.subr.mxu0 0.0
        %1336 = vmatpush1.xpose.msra.mxu0 0.0
        %1337 = vmatprep.subr.mxu0 0.0
        %1338 = vmatpush1.xpose.msra.mxu0 0.0
        %1339 = vmatprep.subr.mxu0 0.0
        %1340 = vmatpush1.xpose.msra.mxu0 %v1307
        %1341 = vmatprep.subr.mxu0 0.0
        %1342 = vmatpush2.xpose.msra.mxu0 0.0
        %1343 = vmatprep.subr.mxu0 0.0
        %1344 = vmatpush2.xpose.msra.mxu0 0.0
        %1345 = vmatprep.subr.mxu0 0.0
        %1346 = vmatpush2.xpose.msra.mxu0 0.0
        %1347 = vmatprep.subr.mxu0 0.0
        %1348 = vmatpush2.xpose.msra.mxu0 0.0
        %1349 = vmatprep.subr.mxu0 0.0
        %1350 = vmatpush2.xpose.msra.mxu0 0.0
        %1351 = vmatprep.subr.mxu0 0.0
        %1352 = vmatpush2.xpose.msra.mxu0 0.0
        %1353 = vmatprep.subr.mxu0 0.0
        %1354 = vmatpush2.xpose.msra.mxu0 0.0
        %1355 = vmatprep.subr.mxu0 0.0
        %1356 = vmatpush2.xpose.msra.mxu0 0.0
        %1357 = vmatprep.subr.mxu0 0.0
        %1358 = vmatpush2.xpose.msra.mxu0 0.0
        %1359 = vmatprep.subr.mxu0 0.0
        %1360 = vmatpush2.xpose.msra.mxu0 0.0
        %1361 = vmatprep.subr.mxu0 0.0
        %1362 = vmatpush2.xpose.msra.mxu0 0.0
        %1363 = vmatprep.subr.mxu0 0.0
        %1364 = vmatpush2.xpose.msra.mxu0 0.0
        %1365 = vmatprep.subr.mxu0 0.0
        %1366 = vmatpush2.xpose.msra.mxu0 0.0
        %1367 = vmatprep.subr.mxu0 0.0
        %1368 = vmatpush2.xpose.msra.mxu0 0.0
        %1369 = vmatprep.subr.mxu0 0.0
        %1370 = vmatpush2.xpose.msra.mxu0 0.0
        %1371 = vmatprep.subr.mxu0 0.0
        %1372 = vmatpush2.xpose.msra.mxu0 0.0
        %1373 = vmatprep.mubr.f32.mxu0 0.0
        %1374 = vmatmul.mubr.f32.gmra.mxu0 %v1304
        %v1375 = vpop.f32.mrf.mxu0
        %v1376 = vadd.f32 0.0, %v1375
        %v1377 = vpop.f32.mrf.mxu0
        %1378 = vdwg.mxu0
        %v1380 = vsel %vm1226, %v561, 0
        %v1383 = vsel %vm1226, %v857, 0
        %1385 = vmatprep.subr.mxu0 0.0
        %1386 = vmatpush1.xpose.msra.mxu0 0.0
        %1387 = vmatprep.subr.mxu0 0.0
        %1388 = vmatpush1.xpose.msra.mxu0 0.0
        %1389 = vmatprep.subr.mxu0 0.0
        %1390 = vmatpush1.xpose.msra.mxu0 0.0
        %1391 = vmatprep.subr.mxu0 0.0
        %1392 = vmatpush1.xpose.msra.mxu0 0.0
        %1393 = vmatprep.subr.mxu0 0.0
        %1394 = vmatpush1.xpose.msra.mxu0 0.0
        %1395 = vmatprep.subr.mxu0 0.0
        %1396 = vmatpush1.xpose.msra.mxu0 0.0
        %1397 = vmatprep.subr.mxu0 0.0
        %1398 = vmatpush1.xpose.msra.mxu0 0.0
        %1399 = vmatprep.subr.mxu0 0.0
        %1400 = vmatpush1.xpose.msra.mxu0 0.0
        %1401 = vmatprep.subr.mxu0 0.0
        %1402 = vmatpush1.xpose.msra.mxu0 0.0
        %1403 = vmatprep.subr.mxu0 0.0
        %1404 = vmatpush1.xpose.msra.mxu0 0.0
        %1405 = vmatprep.subr.mxu0 0.0
        %1406 = vmatpush1.xpose.msra.mxu0 0.0
        %1407 = vmatprep.subr.mxu0 0.0
        %1408 = vmatpush1.xpose.msra.mxu0 0.0
        %1409 = vmatprep.subr.mxu0 0.0
        %1410 = vmatpush1.xpose.msra.mxu0 0.0
        %1411 = vmatprep.subr.mxu0 0.0
        %1412 = vmatpush1.xpose.msra.mxu0 0.0
        %1413 = vmatprep.subr.mxu0 0.0
        %1414 = vmatpush1.xpose.msra.mxu0 0.0
        %1415 = vmatprep.subr.mxu0 0.0
        %1416 = vmatpush1.xpose.msra.mxu0 %v1383
        %1417 = vmatprep.subr.mxu0 0.0
        %1418 = vmatpush2.xpose.msra.mxu0 0.0
        %1419 = vmatprep.subr.mxu0 0.0
        %1420 = vmatpush2.xpose.msra.mxu0 0.0
        %1421 = vmatprep.subr.mxu0 0.0
        %1422 = vmatpush2.xpose.msra.mxu0 0.0
        %1423 = vmatprep.subr.mxu0 0.0
        %1424 = vmatpush2.xpose.msra.mxu0 0.0
        %1425 = vmatprep.subr.mxu0 0.0
        %1426 = vmatpush2.xpose.msra.mxu0 0.0
        %1427 = vmatprep.subr.mxu0 0.0
        %1428 = vmatpush2.xpose.msra.mxu0 0.0
        %1429 = vmatprep.subr.mxu0 0.0
        %1430 = vmatpush2.xpose.msra.mxu0 0.0
        %1431 = vmatprep.subr.mxu0 0.0
        %1432 = vmatpush2.xpose.msra.mxu0 0.0
        %1433 = vmatprep.subr.mxu0 0.0
        %1434 = vmatpush2.xpose.msra.mxu0 0.0
        %1435 = vmatprep.subr.mxu0 0.0
        %1436 = vmatpush2.xpose.msra.mxu0 0.0
        %1437 = vmatprep.subr.mxu0 0.0
        %1438 = vmatpush2.xpose.msra.mxu0 0.0
        %1439 = vmatprep.subr.mxu0 0.0
        %1440 = vmatpush2.xpose.msra.mxu0 0.0
        %1441 = vmatprep.subr.mxu0 0.0
        %1442 = vmatpush2.xpose.msra.mxu0 0.0
        %1443 = vmatprep.subr.mxu0 0.0
        %1444 = vmatpush2.xpose.msra.mxu0 0.0
        %1445 = vmatprep.subr.mxu0 0.0
        %1446 = vmatpush2.xpose.msra.mxu0 0.0
        %1447 = vmatprep.subr.mxu0 0.0
        %1448 = vmatpush2.xpose.msra.mxu0 0.0
        %1449 = vmatprep.mubr.f32.mxu0 0.0
        %1450 = vmatmul.mubr.f32.gmra.mxu0 %v1380
        %v1451 = vpop.f32.mrf.mxu0
        %v1452 = vadd.f32 0.0, %v1451
        %v1453 = vpop.f32.mrf.mxu0
        %1454 = vdwg.mxu0
        %v1456 = vsel %vm1226, %v631, 0
        %v1459 = vsel %vm1226, %v927, 0
        %1461 = vmatprep.subr.mxu0 0.0
        %1462 = vmatpush1.xpose.msra.mxu0 0.0
        %1463 = vmatprep.subr.mxu0 0.0
        %1464 = vmatpush1.xpose.msra.mxu0 0.0
        %1465 = vmatprep.subr.mxu0 0.0
        %1466 = vmatpush1.xpose.msra.mxu0 0.0
        %1467 = vmatprep.subr.mxu0 0.0
        %1468 = vmatpush1.xpose.msra.mxu0 0.0
        %1469 = vmatprep.subr.mxu0 0.0
        %1470 = vmatpush1.xpose.msra.mxu0 0.0
        %1471 = vmatprep.subr.mxu0 0.0
        %1472 = vmatpush1.xpose.msra.mxu0 0.0
        %1473 = vmatprep.subr.mxu0 0.0
        %1474 = vmatpush1.xpose.msra.mxu0 0.0
        %1475 = vmatprep.subr.mxu0 0.0
        %1476 = vmatpush1.xpose.msra.mxu0 0.0
        %1477 = vmatprep.subr.mxu0 0.0
        %1478 = vmatpush1.xpose.msra.mxu0 0.0
        %1479 = vmatprep.subr.mxu0 0.0
        %1480 = vmatpush1.xpose.msra.mxu0 0.0
        %1481 = vmatprep.subr.mxu0 0.0
        %1482 = vmatpush1.xpose.msra.mxu0 0.0
        %1483 = vmatprep.subr.mxu0 0.0
        %1484 = vmatpush1.xpose.msra.mxu0 0.0
        %1485 = vmatprep.subr.mxu0 0.0
        %1486 = vmatpush1.xpose.msra.mxu0 0.0
        %1487 = vmatprep.subr.mxu0 0.0
        %1488 = vmatpush1.xpose.msra.mxu0 0.0
        %1489 = vmatprep.subr.mxu0 0.0
        %1490 = vmatpush1.xpose.msra.mxu0 0.0
        %1491 = vmatprep.subr.mxu0 0.0
        %1492 = vmatpush1.xpose.msra.mxu0 %v1459
        %1493 = vmatprep.subr.mxu0 0.0
        %1494 = vmatpush2.xpose.msra.mxu0 0.0
        %1495 = vmatprep.subr.mxu0 0.0
        %1496 = vmatpush2.xpose.msra.mxu0 0.0
        %1497 = vmatprep.subr.mxu0 0.0
        %1498 = vmatpush2.xpose.msra.mxu0 0.0
        %1499 = vmatprep.subr.mxu0 0.0
        %1500 = vmatpush2.xpose.msra.mxu0 0.0
        %1501 = vmatprep.subr.mxu0 0.0
        %1502 = vmatpush2.xpose.msra.mxu0 0.0
        %1503 = vmatprep.subr.mxu0 0.0
        %1504 = vmatpush2.xpose.msra.mxu0 0.0
        %1505 = vmatprep.subr.mxu0 0.0
        %1506 = vmatpush2.xpose.msra.mxu0 0.0
        %1507 = vmatprep.subr.mxu0 0.0
        %1508 = vmatpush2.xpose.msra.mxu0 0.0
        %1509 = vmatprep.subr.mxu0 0.0
        %1510 = vmatpush2.xpose.msra.mxu0 0.0
        %1511 = vmatprep.subr.mxu0 0.0
        %1512 = vmatpush2.xpose.msra.mxu0 0.0
        %1513 = vmatprep.subr.mxu0 0.0
        %1514 = vmatpush2.xpose.msra.mxu0 0.0
        %1515 = vmatprep.subr.mxu0 0.0
        %1516 = vmatpush2.xpose.msra.mxu0 0.0
        %1517 = vmatprep.subr.mxu0 0.0
        %1518 = vmatpush2.xpose.msra.mxu0 0.0
        %1519 = vmatprep.subr.mxu0 0.0
        %1520 = vmatpush2.xpose.msra.mxu0 0.0
        %1521 = vmatprep.subr.mxu0 0.0
        %1522 = vmatpush2.xpose.msra.mxu0 0.0
        %1523 = vmatprep.subr.mxu0 0.0
        %1524 = vmatpush2.xpose.msra.mxu0 0.0
        %1525 = vmatprep.mubr.f32.mxu0 0.0
        %1526 = vmatmul.mubr.f32.gmra.mxu0 %v1456
        %v1527 = vpop.f32.mrf.mxu0
        %v1528 = vadd.f32 0.0, %v1527
        %v1529 = vpop.f32.mrf.mxu0
        %1530 = vdwg.mxu0
        %vm1531 = vcmask 64512
        %v1532 = vsel %vm1531, %v1300, -inf
        %1533 = vmax.xlane.f32.xlu0 %v1532
        %v1534 = vpop.xlane.xlu0 %1533
        %v1535 = vsel %vm1531, %v1376, -inf
        %1536 = vmax.xlane.f32.xlu0 %v1535
        %v1537 = vpop.xlane.xlu0 %1536
        %v1538 = vsel %vm1531, %v1452, -inf
        %1539 = vmax.xlane.f32.xlu0 %v1538
        %v1540 = vpop.xlane.xlu0 %1539
        %v1541 = vsel %vm1531, %v1528, -inf
        %1542 = vmax.xlane.f32.xlu0 %v1541
        %v1543 = vpop.xlane.xlu0 %1542
        %v1544 = vsub.f32 %v1300, %v1534
        %v1545 = vsub.f32 %v1376, %v1537
        %v1546 = vsub.f32 %v1452, %v1540
        %v1547 = vsub.f32 %v1528, %v1543
        %v1548 = vmul.f32 %v1544, 1.442695
        %v1549 = vpow.pop %v1548
        %v1550 = vmul.f32 %v1545, 1.442695
        %v1551 = vpow.pop %v1550
        %v1552 = vmul.f32 %v1546, 1.442695
        %v1553 = vpow.pop %v1552
        %v1554 = vmul.f32 %v1547, 1.442695
        %v1555 = vpow.pop %v1554
        %v1556 = vsel %vm1531, %v1549, 0.0
        %1557 = vadd.xlane.f32.xlu0 %v1556
        %v1558 = vpop.xlane.xlu0 %1557
        %v1559 = vsel %vm1531, %v1551, 0.0
        %1560 = vadd.xlane.f32.xlu0 %v1559
        %v1561 = vpop.xlane.xlu0 %1560
        %v1562 = vsel %vm1531, %v1553, 0.0
        %1563 = vadd.xlane.f32.xlu0 %v1562
        %v1564 = vpop.xlane.xlu0 %1563
        %v1565 = vsel %vm1531, %v1555, 0.0
        %1566 = vadd.xlane.f32.xlu0 %v1565
        %v1567 = vpop.xlane.xlu0 %1566
        %v1568 = vrcp.pop %v1558
        %v1569 = vrcp.pop %v1561
        %v1570 = vrcp.pop %v1564
        %v1571 = vrcp.pop %v1567
        %v1572 = vmul.f32 %v1549, %v1568
        %v1573 = vmul.f32 %v1551, %v1569
        %v1574 = vmul.f32 %v1553, %v1570
        %v1575 = vmul.f32 %v1555, %v1571
        %v1577 = vsel %vm1531, %v1572, 0
        %1579 = vmatprep.subr.mxu0 0.0
        %1580 = vmatpush1.msra.mxu0 0.0
        %1581 = vmatprep.subr.mxu0 0.0
        %1582 = vmatpush1.msra.mxu0 0.0
        %1583 = vmatprep.subr.mxu0 0.0
        %1584 = vmatpush1.msra.mxu0 0.0
        %1585 = vmatprep.subr.mxu0 0.0
        %1586 = vmatpush1.msra.mxu0 0.0
        %1587 = vmatprep.subr.mxu0 0.0
        %1588 = vmatpush1.msra.mxu0 0.0
        %1589 = vmatprep.subr.mxu0 0.0
        %1590 = vmatpush1.msra.mxu0 0.0
        %1591 = vmatprep.subr.mxu0 0.0
        %1592 = vmatpush1.msra.mxu0 0.0
        %1593 = vmatprep.subr.mxu0 0.0
        %1594 = vmatpush1.msra.mxu0 0.0
        %1595 = vmatprep.subr.mxu0 0.0
        %1596 = vmatpush1.msra.mxu0 0.0
        %1597 = vmatprep.subr.mxu0 0.0
        %1598 = vmatpush1.msra.mxu0 0.0
        %1599 = vmatprep.subr.mxu0 0.0
        %1600 = vmatpush1.msra.mxu0 0.0
        %1601 = vmatprep.subr.mxu0 0.0
        %1602 = vmatpush1.msra.mxu0 0.0
        %1603 = vmatprep.subr.mxu0 0.0
        %1604 = vmatpush1.msra.mxu0 0.0
        %1605 = vmatprep.subr.mxu0 0.0
        %1606 = vmatpush1.msra.mxu0 0.0
        %1607 = vmatprep.subr.mxu0 0.0
        %1608 = vmatpush1.msra.mxu0 0.0
        %1609 = vmatprep.subr.mxu0 0.0
        %1610 = vmatpush1.msra.mxu0 %v1013
        %1611 = vmatprep.subr.mxu0 0.0
        %1612 = vmatpush2.msra.mxu0 0.0
        %1613 = vmatprep.subr.mxu0 0.0
        %1614 = vmatpush2.msra.mxu0 0.0
        %1615 = vmatprep.subr.mxu0 0.0
        %1616 = vmatpush2.msra.mxu0 0.0
        %1617 = vmatprep.subr.mxu0 0.0
        %1618 = vmatpush2.msra.mxu0 0.0
        %1619 = vmatprep.subr.mxu0 0.0
        %1620 = vmatpush2.msra.mxu0 0.0
        %1621 = vmatprep.subr.mxu0 0.0
        %1622 = vmatpush2.msra.mxu0 0.0
        %1623 = vmatprep.subr.mxu0 0.0
        %1624 = vmatpush2.msra.mxu0 0.0
        %1625 = vmatprep.subr.mxu0 0.0
        %1626 = vmatpush2.msra.mxu0 0.0
        %1627 = vmatprep.subr.mxu0 0.0
        %1628 = vmatpush2.msra.mxu0 0.0
        %1629 = vmatprep.subr.mxu0 0.0
        %1630 = vmatpush2.msra.mxu0 0.0
        %1631 = vmatprep.subr.mxu0 0.0
        %1632 = vmatpush2.msra.mxu0 0.0
        %1633 = vmatprep.subr.mxu0 0.0
        %1634 = vmatpush2.msra.mxu0 0.0
        %1635 = vmatprep.subr.mxu0 0.0
        %1636 = vmatpush2.msra.mxu0 0.0
        %1637 = vmatprep.subr.mxu0 0.0
        %1638 = vmatpush2.msra.mxu0 0.0
        %1639 = vmatprep.subr.mxu0 0.0
        %1640 = vmatpush2.msra.mxu0 0.0
        %1641 = vmatprep.subr.mxu0 0.0
        %1642 = vmatpush2.msra.mxu0 0.0
        %1643 = vmatprep.mubr.f32.mxu0 0.0
        %1644 = vmatmul.mubr.f32.gmra.mxu0 %v1577
        %v1645 = vpop.f32.mrf.mxu0
        %v1646 = vadd.f32 0.0, %v1645
        %v1647 = vpop.f32.mrf.mxu0
        %1648 = vdwg.mxu0
        %v1650 = vsel %vm1531, %v1573, 0
        %1652 = vmatprep.subr.mxu0 0.0
        %1653 = vmatpush1.msra.mxu0 0.0
        %1654 = vmatprep.subr.mxu0 0.0
        %1655 = vmatpush1.msra.mxu0 0.0
        %1656 = vmatprep.subr.mxu0 0.0
        %1657 = vmatpush1.msra.mxu0 0.0
        %1658 = vmatprep.subr.mxu0 0.0
        %1659 = vmatpush1.msra.mxu0 0.0
        %1660 = vmatprep.subr.mxu0 0.0
        %1661 = vmatpush1.msra.mxu0 0.0
        %1662 = vmatprep.subr.mxu0 0.0
        %1663 = vmatpush1.msra.mxu0 0.0
        %1664 = vmatprep.subr.mxu0 0.0
        %1665 = vmatpush1.msra.mxu0 0.0
        %1666 = vmatprep.subr.mxu0 0.0
        %1667 = vmatpush1.msra.mxu0 0.0
        %1668 = vmatprep.subr.mxu0 0.0
        %1669 = vmatpush1.msra.mxu0 0.0
        %1670 = vmatprep.subr.mxu0 0.0
        %1671 = vmatpush1.msra.mxu0 0.0
        %1672 = vmatprep.subr.mxu0 0.0
        %1673 = vmatpush1.msra.mxu0 0.0
        %1674 = vmatprep.subr.mxu0 0.0
        %1675 = vmatpush1.msra.mxu0 0.0
        %1676 = vmatprep.subr.mxu0 0.0
        %1677 = vmatpush1.msra.mxu0 0.0
        %1678 = vmatprep.subr.mxu0 0.0
        %1679 = vmatpush1.msra.mxu0 0.0
        %1680 = vmatprep.subr.mxu0 0.0
        %1681 = vmatpush1.msra.mxu0 0.0
        %1682 = vmatprep.subr.mxu0 0.0
        %1683 = vmatpush1.msra.mxu0 %v1083
        %1684 = vmatprep.subr.mxu0 0.0
        %1685 = vmatpush2.msra.mxu0 0.0
        %1686 = vmatprep.subr.mxu0 0.0
        %1687 = vmatpush2.msra.mxu0 0.0
        %1688 = vmatprep.subr.mxu0 0.0
        %1689 = vmatpush2.msra.mxu0 0.0
        %1690 = vmatprep.subr.mxu0 0.0
        %1691 = vmatpush2.msra.mxu0 0.0
        %1692 = vmatprep.subr.mxu0 0.0
        %1693 = vmatpush2.msra.mxu0 0.0
        %1694 = vmatprep.subr.mxu0 0.0
        %1695 = vmatpush2.msra.mxu0 0.0
        %1696 = vmatprep.subr.mxu0 0.0
        %1697 = vmatpush2.msra.mxu0 0.0
        %1698 = vmatprep.subr.mxu0 0.0
        %1699 = vmatpush2.msra.mxu0 0.0
        %1700 = vmatprep.subr.mxu0 0.0
        %1701 = vmatpush2.msra.mxu0 0.0
        %1702 = vmatprep.subr.mxu0 0.0
        %1703 = vmatpush2.msra.mxu0 0.0
        %1704 = vmatprep.subr.mxu0 0.0
        %1705 = vmatpush2.msra.mxu0 0.0
        %1706 = vmatprep.subr.mxu0 0.0
        %1707 = vmatpush2.msra.mxu0 0.0
        %1708 = vmatprep.subr.mxu0 0.0
        %1709 = vmatpush2.msra.mxu0 0.0
        %1710 = vmatprep.subr.mxu0 0.0
        %1711 = vmatpush2.msra.mxu0 0.0
        %1712 = vmatprep.subr.mxu0 0.0
        %1713 = vmatpush2.msra.mxu0 0.0
        %1714 = vmatprep.subr.mxu0 0.0
        %1715 = vmatpush2.msra.mxu0 0.0
        %1716 = vmatprep.mubr.f32.mxu0 0.0
        %1717 = vmatmul.mubr.f32.gmra.mxu0 %v1650
        %v1718 = vpop.f32.mrf.mxu0
        %v1719 = vadd.f32 0.0, %v1718
        %v1720 = vpop.f32.mrf.mxu0
        %1721 = vdwg.mxu0
        %v1723 = vsel %vm1531, %v1574, 0
        %1725 = vmatprep.subr.mxu0 0.0
        %1726 = vmatpush1.msra.mxu0 0.0
        %1727 = vmatprep.subr.mxu0 0.0
        %1728 = vmatpush1.msra.mxu0 0.0
        %1729 = vmatprep.subr.mxu0 0.0
        %1730 = vmatpush1.msra.mxu0 0.0
        %1731 = vmatprep.subr.mxu0 0.0
        %1732 = vmatpush1.msra.mxu0 0.0
        %1733 = vmatprep.subr.mxu0 0.0
        %1734 = vmatpush1.msra.mxu0 0.0
        %1735 = vmatprep.subr.mxu0 0.0
        %1736 = vmatpush1.msra.mxu0 0.0
        %1737 = vmatprep.subr.mxu0 0.0
        %1738 = vmatpush1.msra.mxu0 0.0
        %1739 = vmatprep.subr.mxu0 0.0
        %1740 = vmatpush1.msra.mxu0 0.0
        %1741 = vmatprep.subr.mxu0 0.0
        %1742 = vmatpush1.msra.mxu0 0.0
        %1743 = vmatprep.subr.mxu0 0.0
        %1744 = vmatpush1.msra.mxu0 0.0
        %1745 = vmatprep.subr.mxu0 0.0
        %1746 = vmatpush1.msra.mxu0 0.0
        %1747 = vmatprep.subr.mxu0 0.0
        %1748 = vmatpush1.msra.mxu0 0.0
        %1749 = vmatprep.subr.mxu0 0.0
        %1750 = vmatpush1.msra.mxu0 0.0
        %1751 = vmatprep.subr.mxu0 0.0
        %1752 = vmatpush1.msra.mxu0 0.0
        %1753 = vmatprep.subr.mxu0 0.0
        %1754 = vmatpush1.msra.mxu0 0.0
        %1755 = vmatprep.subr.mxu0 0.0
        %1756 = vmatpush1.msra.mxu0 %v1153
        %1757 = vmatprep.subr.mxu0 0.0
        %1758 = vmatpush2.msra.mxu0 0.0
        %1759 = vmatprep.subr.mxu0 0.0
        %1760 = vmatpush2.msra.mxu0 0.0
        %1761 = vmatprep.subr.mxu0 0.0
        %1762 = vmatpush2.msra.mxu0 0.0
        %1763 = vmatprep.subr.mxu0 0.0
        %1764 = vmatpush2.msra.mxu0 0.0
        %1765 = vmatprep.subr.mxu0 0.0
        %1766 = vmatpush2.msra.mxu0 0.0
        %1767 = vmatprep.subr.mxu0 0.0
        %1768 = vmatpush2.msra.mxu0 0.0
        %1769 = vmatprep.subr.mxu0 0.0
        %1770 = vmatpush2.msra.mxu0 0.0
        %1771 = vmatprep.subr.mxu0 0.0
        %1772 = vmatpush2.msra.mxu0 0.0
        %1773 = vmatprep.subr.mxu0 0.0
        %1774 = vmatpush2.msra.mxu0 0.0
        %1775 = vmatprep.subr.mxu0 0.0
        %1776 = vmatpush2.msra.mxu0 0.0
        %1777 = vmatprep.subr.mxu0 0.0
        %1778 = vmatpush2.msra.mxu0 0.0
        %1779 = vmatprep.subr.mxu0 0.0
        %1780 = vmatpush2.msra.mxu0 0.0
        %1781 = vmatprep.subr.mxu0 0.0
        %1782 = vmatpush2.msra.mxu0 0.0
        %1783 = vmatprep.subr.mxu0 0.0
        %1784 = vmatpush2.msra.mxu0 0.0
        %1785 = vmatprep.subr.mxu0 0.0
        %1786 = vmatpush2.msra.mxu0 0.0
        %1787 = vmatprep.subr.mxu0 0.0
        %1788 = vmatpush2.msra.mxu0 0.0
        %1789 = vmatprep.mubr.f32.mxu0 0.0
        %1790 = vmatmul.mubr.f32.gmra.mxu0 %v1723
        %v1791 = vpop.f32.mrf.mxu0
        %v1792 = vadd.f32 0.0, %v1791
        %v1793 = vpop.f32.mrf.mxu0
        %1794 = vdwg.mxu0
        %v1796 = vsel %vm1531, %v1575, 0
        %1798 = vmatprep.subr.mxu0 0.0
        %1799 = vmatpush1.msra.mxu0 0.0
        %1800 = vmatprep.subr.mxu0 0.0
        %1801 = vmatpush1.msra.mxu0 0.0
        %1802 = vmatprep.subr.mxu0 0.0
        %1803 = vmatpush1.msra.mxu0 0.0
        %1804 = vmatprep.subr.mxu0 0.0
        %1805 = vmatpush1.msra.mxu0 0.0
        %1806 = vmatprep.subr.mxu0 0.0
        %1807 = vmatpush1.msra.mxu0 0.0
        %1808 = vmatprep.subr.mxu0 0.0
        %1809 = vmatpush1.msra.mxu0 0.0
        %1810 = vmatprep.subr.mxu0 0.0
        %1811 = vmatpush1.msra.mxu0 0.0
        %1812 = vmatprep.subr.mxu0 0.0
        %1813 = vmatpush1.msra.mxu0 0.0
        %1814 = vmatprep.subr.mxu0 0.0
        %1815 = vmatpush1.msra.mxu0 0.0
        %1816 = vmatprep.subr.mxu0 0.0
        %1817 = vmatpush1.msra.mxu0 0.0
        %1818 = vmatprep.subr.mxu0 0.0
        %1819 = vmatpush1.msra.mxu0 0.0
        %1820 = vmatprep.subr.mxu0 0.0
        %1821 = vmatpush1.msra.mxu0 0.0
        %1822 = vmatprep.subr.mxu0 0.0
        %1823 = vmatpush1.msra.mxu0 0.0
        %1824 = vmatprep.subr.mxu0 0.0
        %1825 = vmatpush1.msra.mxu0 0.0
        %1826 = vmatprep.subr.mxu0 0.0
        %1827 = vmatpush1.msra.mxu0 0.0
        %1828 = vmatprep.subr.mxu0 0.0
        %1829 = vmatpush1.msra.mxu0 %v1223
        %1830 = vmatprep.subr.mxu0 0.0
        %1831 = vmatpush2.msra.mxu0 0.0
        %1832 = vmatprep.subr.mxu0 0.0
        %1833 = vmatpush2.msra.mxu0 0.0
        %1834 = vmatprep.subr.mxu0 0.0
        %1835 = vmatpush2.msra.mxu0 0.0
        %1836 = vmatprep.subr.mxu0 0.0
        %1837 = vmatpush2.msra.mxu0 0.0
        %1838 = vmatprep.subr.mxu0 0.0
        %1839 = vmatpush2.msra.mxu0 0.0
        %1840 = vmatprep.subr.mxu0 0.0
        %1841 = vmatpush2.msra.mxu0 0.0
        %1842 = vmatprep.subr.mxu0 0.0
        %1843 = vmatpush2.msra.mxu0 0.0
        %1844 = vmatprep.subr.mxu0 0.0
        %1845 = vmatpush2.msra.mxu0 0.0
        %1846 = vmatprep.subr.mxu0 0.0
        %1847 = vmatpush2.msra.mxu0 0.0
        %1848 = vmatprep.subr.mxu0 0.0
        %1849 = vmatpush2.msra.mxu0 0.0
        %1850 = vmatprep.subr.mxu0 0.0
        %1851 = vmatpush2.msra.mxu0 0.0
        %1852 = vmatprep.subr.mxu0 0.0
        %1853 = vmatpush2.msra.mxu0 0.0
        %1854 = vmatprep.subr.mxu0 0.0
        %1855 = vmatpush2.msra.mxu0 0.0
        %1856 = vmatprep.subr.mxu0 0.0
        %1857 = vmatpush2.msra.mxu0 0.0
        %1858 = vmatprep.subr.mxu0 0.0
        %1859 = vmatpush2.msra.mxu0 0.0
        %1860 = vmatprep.subr.mxu0 0.0
        %1861 = vmatpush2.msra.mxu0 0.0
        %1862 = vmatprep.mubr.f32.mxu0 0.0
        %1863 = vmatmul.mubr.f32.gmra.mxu0 %v1796
        %v1864 = vpop.f32.mrf.mxu0
        %v1865 = vadd.f32 0.0, %v1864
        %v1866 = vpop.f32.mrf.mxu0
        %1867 = vdwg.mxu0
        %v1868 = vld [vmem:[%s6] sm:$0xff]
        %v1869 = vld [vmem:[%s6 + $0x8] sm:$0xff]
        %v1870 = vld [vmem:[%s6 + $0x10] sm:$0xff]
        %v1871 = vld [vmem:[%s6 + $0x18] sm:$0xff]
        %v1872 = vld [vmem:[%s6 + $0x20] sm:$0xff]
        %v1873 = vld [vmem:[%s6 + $0x28] sm:$0xff]
        %v1874 = vld [vmem:[%s6 + $0x30] sm:$0xff]
        %v1875 = vld [vmem:[%s6 + $0x38] sm:$0xff]
        %v1877 = vsel %vm1226, %v1646, 0
        %1879 = vmatprep.subr.mxu0 0.0
        %1880 = vmatpush1.msra.mxu0 0.0
        %1881 = vmatprep.subr.mxu0 0.0
        %1882 = vmatpush1.msra.mxu0 0.0
        %1883 = vmatprep.subr.mxu0 0.0
        %1884 = vmatpush1.msra.mxu0 0.0
        %1885 = vmatprep.subr.mxu0 0.0
        %1886 = vmatpush1.msra.mxu0 0.0
        %1887 = vmatprep.subr.mxu0 0.0
        %1888 = vmatpush1.msra.mxu0 0.0
        %1889 = vmatprep.subr.mxu0 0.0
        %1890 = vmatpush1.msra.mxu0 0.0
        %1891 = vmatprep.subr.mxu0 0.0
        %1892 = vmatpush1.msra.mxu0 0.0
        %1893 = vmatprep.subr.mxu0 0.0
        %1894 = vmatpush1.msra.mxu0 0.0
        %1895 = vmatprep.subr.mxu0 0.0
        %1896 = vmatpush1.msra.mxu0 0.0
        %1897 = vmatprep.subr.mxu0 0.0
        %1898 = vmatpush1.msra.mxu0 0.0
        %1899 = vmatprep.subr.mxu0 0.0
        %1900 = vmatpush1.msra.mxu0 0.0
        %1901 = vmatprep.subr.mxu0 0.0
        %1902 = vmatpush1.msra.mxu0 0.0
        %1903 = vmatprep.subr.mxu0 0.0
        %1904 = vmatpush1.msra.mxu0 0.0
        %1905 = vmatprep.subr.mxu0 0.0
        %1906 = vmatpush1.msra.mxu0 0.0
        %1907 = vmatprep.subr.mxu0 0.0
        %1908 = vmatpush1.msra.mxu0 %v1869
        %1909 = vmatprep.subr.mxu0 0.0
        %1910 = vmatpush1.msra.mxu0 %v1868
        %1911 = vmatprep.subr.mxu0 0.0
        %1912 = vmatpush2.msra.mxu0 0.0
        %1913 = vmatprep.subr.mxu0 0.0
        %1914 = vmatpush2.msra.mxu0 0.0
        %1915 = vmatprep.subr.mxu0 0.0
        %1916 = vmatpush2.msra.mxu0 0.0
        %1917 = vmatprep.subr.mxu0 0.0
        %1918 = vmatpush2.msra.mxu0 0.0
        %1919 = vmatprep.subr.mxu0 0.0
        %1920 = vmatpush2.msra.mxu0 0.0
        %1921 = vmatprep.subr.mxu0 0.0
        %1922 = vmatpush2.msra.mxu0 0.0
        %1923 = vmatprep.subr.mxu0 0.0
        %1924 = vmatpush2.msra.mxu0 0.0
        %1925 = vmatprep.subr.mxu0 0.0
        %1926 = vmatpush2.msra.mxu0 0.0
        %1927 = vmatprep.subr.mxu0 0.0
        %1928 = vmatpush2.msra.mxu0 0.0
        %1929 = vmatprep.subr.mxu0 0.0
        %1930 = vmatpush2.msra.mxu0 0.0
        %1931 = vmatprep.subr.mxu0 0.0
        %1932 = vmatpush2.msra.mxu0 0.0
        %1933 = vmatprep.subr.mxu0 0.0
        %1934 = vmatpush2.msra.mxu0 0.0
        %1935 = vmatprep.subr.mxu0 0.0
        %1936 = vmatpush2.msra.mxu0 0.0
        %1937 = vmatprep.subr.mxu0 0.0
        %1938 = vmatpush2.msra.mxu0 0.0
        %1939 = vmatprep.subr.mxu0 0.0
        %1940 = vmatpush2.msra.mxu0 0.0
        %1941 = vmatprep.subr.mxu0 0.0
        %1942 = vmatpush2.msra.mxu0 0.0
        %1943 = vmatprep.mubr.f32.mxu0 0.0
        %1944 = vmatmul.mubr.f32.gmra.mxu0 %v1877
        %v1945 = vpop.f32.mrf.mxu0
        %v1946 = vadd.f32 0.0, %v1945
        %v1947 = vpop.f32.mrf.mxu0
        %1948 = vdwg.mxu0
        %v1950 = vsel %vm1226, %v1719, 0
        %1952 = vmatprep.subr.mxu0 0.0
        %1953 = vmatpush1.msra.mxu0 0.0
        %1954 = vmatprep.subr.mxu0 0.0
        %1955 = vmatpush1.msra.mxu0 0.0
        %1956 = vmatprep.subr.mxu0 0.0
        %1957 = vmatpush1.msra.mxu0 0.0
        %1958 = vmatprep.subr.mxu0 0.0
        %1959 = vmatpush1.msra.mxu0 0.0
        %1960 = vmatprep.subr.mxu0 0.0
        %1961 = vmatpush1.msra.mxu0 0.0
        %1962 = vmatprep.subr.mxu0 0.0
        %1963 = vmatpush1.msra.mxu0 0.0
        %1964 = vmatprep.subr.mxu0 0.0
        %1965 = vmatpush1.msra.mxu0 0.0
        %1966 = vmatprep.subr.mxu0 0.0
        %1967 = vmatpush1.msra.mxu0 0.0
        %1968 = vmatprep.subr.mxu0 0.0
        %1969 = vmatpush1.msra.mxu0 0.0
        %1970 = vmatprep.subr.mxu0 0.0
        %1971 = vmatpush1.msra.mxu0 0.0
        %1972 = vmatprep.subr.mxu0 0.0
        %1973 = vmatpush1.msra.mxu0 0.0
        %1974 = vmatprep.subr.mxu0 0.0
        %1975 = vmatpush1.msra.mxu0 0.0
        %1976 = vmatprep.subr.mxu0 0.0
        %1977 = vmatpush1.msra.mxu0 0.0
        %1978 = vmatprep.subr.mxu0 0.0
        %1979 = vmatpush1.msra.mxu0 0.0
        %1980 = vmatprep.subr.mxu0 0.0
        %1981 = vmatpush1.msra.mxu0 %v1871
        %1982 = vmatprep.subr.mxu0 0.0
        %1983 = vmatpush1.msra.mxu0 %v1870
        %1984 = vmatprep.subr.mxu0 0.0
        %1985 = vmatpush2.msra.mxu0 0.0
        %1986 = vmatprep.subr.mxu0 0.0
        %1987 = vmatpush2.msra.mxu0 0.0
        %1988 = vmatprep.subr.mxu0 0.0
        %1989 = vmatpush2.msra.mxu0 0.0
        %1990 = vmatprep.subr.mxu0 0.0
        %1991 = vmatpush2.msra.mxu0 0.0
        %1992 = vmatprep.subr.mxu0 0.0
        %1993 = vmatpush2.msra.mxu0 0.0
        %1994 = vmatprep.subr.mxu0 0.0
        %1995 = vmatpush2.msra.mxu0 0.0
        %1996 = vmatprep.subr.mxu0 0.0
        %1997 = vmatpush2.msra.mxu0 0.0
        %1998 = vmatprep.subr.mxu0 0.0
        %1999 = vmatpush2.msra.mxu0 0.0
        %2000 = vmatprep.subr.mxu0 0.0
        %2001 = vmatpush2.msra.mxu0 0.0
        %2002 = vmatprep.subr.mxu0 0.0
        %2003 = vmatpush2.msra.mxu0 0.0
        %2004 = vmatprep.subr.mxu0 0.0
        %2005 = vmatpush2.msra.mxu0 0.0
        %2006 = vmatprep.subr.mxu0 0.0
        %2007 = vmatpush2.msra.mxu0 0.0
        %2008 = vmatprep.subr.mxu0 0.0
        %2009 = vmatpush2.msra.mxu0 0.0
        %2010 = vmatprep.subr.mxu0 0.0
        %2011 = vmatpush2.msra.mxu0 0.0
        %2012 = vmatprep.subr.mxu0 0.0
        %2013 = vmatpush2.msra.mxu0 0.0
        %2014 = vmatprep.subr.mxu0 0.0
        %2015 = vmatpush2.msra.mxu0 0.0
        %2016 = vmatprep.mubr.f32.mxu0 0.0
        %2017 = vmatmul.mubr.f32.gmra.mxu0 %v1950
        %v2018 = vpop.f32.mrf.mxu0
        %v2019 = vadd.f32 0.0, %v2018
        %v2020 = vpop.f32.mrf.mxu0
        %2021 = vdwg.mxu0
        %v2023 = vsel %vm1226, %v1792, 0
        %2025 = vmatprep.subr.mxu0 0.0
        %2026 = vmatpush1.msra.mxu0 0.0
        %2027 = vmatprep.subr.mxu0 0.0
        %2028 = vmatpush1.msra.mxu0 0.0
        %2029 = vmatprep.subr.mxu0 0.0
        %2030 = vmatpush1.msra.mxu0 0.0
        %2031 = vmatprep.subr.mxu0 0.0
        %2032 = vmatpush1.msra.mxu0 0.0
        %2033 = vmatprep.subr.mxu0 0.0
        %2034 = vmatpush1.msra.mxu0 0.0
        %2035 = vmatprep.subr.mxu0 0.0
        %2036 = vmatpush1.msra.mxu0 0.0
        %2037 = vmatprep.subr.mxu0 0.0
        %2038 = vmatpush1.msra.mxu0 0.0
        %2039 = vmatprep.subr.mxu0 0.0
        %2040 = vmatpush1.msra.mxu0 0.0
        %2041 = vmatprep.subr.mxu0 0.0
        %2042 = vmatpush1.msra.mxu0 0.0
        %2043 = vmatprep.subr.mxu0 0.0
        %2044 = vmatpush1.msra.mxu0 0.0
        %2045 = vmatprep.subr.mxu0 0.0
        %2046 = vmatpush1.msra.mxu0 0.0
        %2047 = vmatprep.subr.mxu0 0.0
        %2048 = vmatpush1.msra.mxu0 0.0
        %2049 = vmatprep.subr.mxu0 0.0
        %2050 = vmatpush1.msra.mxu0 0.0
        %2051 = vmatprep.subr.mxu0 0.0
        %2052 = vmatpush1.msra.mxu0 0.0
        %2053 = vmatprep.subr.mxu0 0.0
        %2054 = vmatpush1.msra.mxu0 %v1873
        %2055 = vmatprep.subr.mxu0 0.0
        %2056 = vmatpush1.msra.mxu0 %v1872
        %2057 = vmatprep.subr.mxu0 0.0
        %2058 = vmatpush2.msra.mxu0 0.0
        %2059 = vmatprep.subr.mxu0 0.0
        %2060 = vmatpush2.msra.mxu0 0.0
        %2061 = vmatprep.subr.mxu0 0.0
        %2062 = vmatpush2.msra.mxu0 0.0
        %2063 = vmatprep.subr.mxu0 0.0
        %2064 = vmatpush2.msra.mxu0 0.0
        %2065 = vmatprep.subr.mxu0 0.0
        %2066 = vmatpush2.msra.mxu0 0.0
        %2067 = vmatprep.subr.mxu0 0.0
        %2068 = vmatpush2.msra.mxu0 0.0
        %2069 = vmatprep.subr.mxu0 0.0
        %2070 = vmatpush2.msra.mxu0 0.0
        %2071 = vmatprep.subr.mxu0 0.0
        %2072 = vmatpush2.msra.mxu0 0.0
        %2073 = vmatprep.subr.mxu0 0.0
        %2074 = vmatpush2.msra.mxu0 0.0
        %2075 = vmatprep.subr.mxu0 0.0
        %2076 = vmatpush2.msra.mxu0 0.0
        %2077 = vmatprep.subr.mxu0 0.0
        %2078 = vmatpush2.msra.mxu0 0.0
        %2079 = vmatprep.subr.mxu0 0.0
        %2080 = vmatpush2.msra.mxu0 0.0
        %2081 = vmatprep.subr.mxu0 0.0
        %2082 = vmatpush2.msra.mxu0 0.0
        %2083 = vmatprep.subr.mxu0 0.0
        %2084 = vmatpush2.msra.mxu0 0.0
        %2085 = vmatprep.subr.mxu0 0.0
        %2086 = vmatpush2.msra.mxu0 0.0
        %2087 = vmatprep.subr.mxu0 0.0
        %2088 = vmatpush2.msra.mxu0 0.0
        %2089 = vmatprep.mubr.f32.mxu0 0.0
        %2090 = vmatmul.mubr.f32.gmra.mxu0 %v2023
        %v2091 = vpop.f32.mrf.mxu0
        %v2092 = vadd.f32 0.0, %v2091
        %v2093 = vpop.f32.mrf.mxu0
        %2094 = vdwg.mxu0
        %v2096 = vsel %vm1226, %v1865, 0
        %2098 = vmatprep.subr.mxu0 0.0
        %2099 = vmatpush1.msra.mxu0 0.0
        %2100 = vmatprep.subr.mxu0 0.0
        %2101 = vmatpush1.msra.mxu0 0.0
        %2102 = vmatprep.subr.mxu0 0.0
        %2103 = vmatpush1.msra.mxu0 0.0
        %2104 = vmatprep.subr.mxu0 0.0
        %2105 = vmatpush1.msra.mxu0 0.0
        %2106 = vmatprep.subr.mxu0 0.0
        %2107 = vmatpush1.msra.mxu0 0.0
        %2108 = vmatprep.subr.mxu0 0.0
        %2109 = vmatpush1.msra.mxu0 0.0
        %2110 = vmatprep.subr.mxu0 0.0
        %2111 = vmatpush1.msra.mxu0 0.0
        %2112 = vmatprep.subr.mxu0 0.0
        %2113 = vmatpush1.msra.mxu0 0.0
        %2114 = vmatprep.subr.mxu0 0.0
        %2115 = vmatpush1.msra.mxu0 0.0
        %2116 = vmatprep.subr.mxu0 0.0
        %2117 = vmatpush1.msra.mxu0 0.0
        %2118 = vmatprep.subr.mxu0 0.0
        %2119 = vmatpush1.msra.mxu0 0.0
        %2120 = vmatprep.subr.mxu0 0.0
        %2121 = vmatpush1.msra.mxu0 0.0
        %2122 = vmatprep.subr.mxu0 0.0
        %2123 = vmatpush1.msra.mxu0 0.0
        %2124 = vmatprep.subr.mxu0 0.0
        %2125 = vmatpush1.msra.mxu0 0.0
        %2126 = vmatprep.subr.mxu0 0.0
        %2127 = vmatpush1.msra.mxu0 %v1875
        %2128 = vmatprep.subr.mxu0 0.0
        %2129 = vmatpush1.msra.mxu0 %v1874
        %2130 = vmatprep.subr.mxu0 0.0
        %2131 = vmatpush2.msra.mxu0 0.0
        %2132 = vmatprep.subr.mxu0 0.0
        %2133 = vmatpush2.msra.mxu0 0.0
        %2134 = vmatprep.subr.mxu0 0.0
        %2135 = vmatpush2.msra.mxu0 0.0
        %2136 = vmatprep.subr.mxu0 0.0
        %2137 = vmatpush2.msra.mxu0 0.0
        %2138 = vmatprep.subr.mxu0 0.0
        %2139 = vmatpush2.msra.mxu0 0.0
        %2140 = vmatprep.subr.mxu0 0.0
        %2141 = vmatpush2.msra.mxu0 0.0
        %2142 = vmatprep.subr.mxu0 0.0
        %2143 = vmatpush2.msra.mxu0 0.0
        %2144 = vmatprep.subr.mxu0 0.0
        %2145 = vmatpush2.msra.mxu0 0.0
        %2146 = vmatprep.subr.mxu0 0.0
        %2147 = vmatpush2.msra.mxu0 0.0
        %2148 = vmatprep.subr.mxu0 0.0
        %2149 = vmatpush2.msra.mxu0 0.0
        %2150 = vmatprep.subr.mxu0 0.0
        %2151 = vmatpush2.msra.mxu0 0.0
        %2152 = vmatprep.subr.mxu0 0.0
        %2153 = vmatpush2.msra.mxu0 0.0
        %2154 = vmatprep.subr.mxu0 0.0
        %2155 = vmatpush2.msra.mxu0 0.0
        %2156 = vmatprep.subr.mxu0 0.0
        %2157 = vmatpush2.msra.mxu0 0.0
        %2158 = vmatprep.subr.mxu0 0.0
        %2159 = vmatpush2.msra.mxu0 0.0
        %2160 = vmatprep.subr.mxu0 0.0
        %2161 = vmatpush2.msra.mxu0 0.0
        %2162 = vmatprep.mubr.f32.mxu0 0.0
        %2163 = vmatmul.mubr.f32.gmra.mxu0 %v2096
        %v2164 = vpop.f32.mrf.mxu0
        %v2165 = vadd.f32 0.0, %v2164
        %v2166 = vpop.f32.mrf.mxu0
        %2167 = vdwg.mxu0
        %v2168 = vsel %vm302, %v1946, 0.0
        %v2169 = vsel %vm302, %v2019, 0.0
        %v2170 = vadd.f32 %v2168, %v2169
        %v2171 = vsel %vm302, %v2092, 0.0
        %v2172 = vadd.f32 %v2170, %v2171
        %v2173 = vsel %vm302, %v2165, 0.0
        %v2174 = vadd.f32 %v2172, %v2173
        %v2175 = vld [vmem:[%s7] sm:$0x1]
        %v2177 = vlaneseq
        %v2178 = vshrl.u32 %v2177, 7
        %v2179 = vsub.s32 0, %v2178
        %v2180 = vrot.slane %v2175, %v2179
        %v2182 = vadd.f32 %v2174, %v2180
        %2183 = vst.msk [vmem:[%s296] sm:$0xff] %vm302, %v2182
        %s2184 = sand.u32 %s203, 1
        %s2185 = scalar_lea.sflag [#allocation3], %s2184
        %s2186 = sand.u32 %s203, 1
        %s2187 = smul.addr %s2186, 8
        %s2188 = scalar_lea.vmem [#allocation2], %s2187
        // Predicated region
        $region53: #{tpu_custom_call.1} parent=51 // pred_check
          %p2189 = pneg %p213
        $region54: #{tpu_custom_call.1} parent=51 // pred_check_branch
          %2191 = sbr.rel (%p2189) target = $region56
        $region55: #{tpu_custom_call.1} parent=51 // pred_region
          %s2193 = ssub.s32 128, 128
          %2194 = vsyncadd %s2185, %s2193
          %s2195 = smul.addr %s22, 128
          %s2196 = scalar_lea.hbm %s8, %s2195
          %s2198 = sshll.u32 %s2188, 4
          %s2199 = int_to_ptr.vmem [resolvable:$true] %s2198
          %2201 = dma.vmem_to_hbm [thread:$0]  %s2199, 128, %s2196, %s2185
        $region56: #{tpu_custom_call.1} parent=51 // pred_fallthru
          _
      $region52: #{tpu_custom_call.1} parent=5 // pred_fallthru
        _
      %p2202 = scmp.le.s32.totalorder 2, %s17
      // Predicated region
      $region57: #{tpu_custom_call.1} parent=5 // pred_check
        %p2203 = pneg %p2202
      $region58: #{tpu_custom_call.1} parent=5 // pred_check_branch
        %2205 = sbr.rel (%p2203) target = $region60
      $region59: #{tpu_custom_call.1} parent=5 // pred_region
        %s2206 = ssub.s32 %s17, 2
        // Predicated region
        $region61: #{tpu_custom_call.1} parent=59 // pred_check
          %p2207 = pneg %p219
        $region62: #{tpu_custom_call.1} parent=59 // pred_check_branch
          %2209 = sbr.rel (%p2207) target = $region64
        $region63: #{tpu_custom_call.1} parent=59 // pred_region
          %s2210 = sand.u32 %s204, 1
          %s2211 = scalar_lea.sflag [#allocation3], %s2210
          %s2212 = sand.u32 %s204, 1
          %s2213 = smul.addr %s2212, 8
          %s2214 = scalar_lea.vmem [#allocation2], %s2213
          %2215 = dma.done %s2211, 128
        $region64: #{tpu_custom_call.1} parent=59 // pred_fallthru
          _
      $region60: #{tpu_custom_call.1} parent=5 // pred_fallthru
        _
    $region6: #{tpu_custom_call.1} parent=1 // loop_footer
      %s21 = sadd.s32 1, %s17
    $region7: #{tpu_custom_call.1} parent=1 // loop_footer_branch
      %16 = sbr.rel target = $region3
    $region8: #{tpu_custom_call.1} parent=1 // loop_exit
      _
    %2216 = vsyncpa [#allocation3], 1
    %s2217 = scalar_lea.sflag [#allocation3], 1
    %2218 = vsyncpa %s2217, 1

</llo_original>
